<compile_context>
chip_gen: v5e
topology: v5e:2x2
jax: 0.10.0
libtpu: 0.0.40
codegen_flags: <defaults>
</compile_context>

<pallas_src>
import functools
import math

import numpy as np

import jax
import jax.numpy as jnp
from jax.experimental import pallas as pl
from jax.experimental.pallas import tpu as pltpu


def _round_up(x, m):
    return (x + m - 1) // m * m


# --------------------------------------------------------------------------
# Pallas kernels
# --------------------------------------------------------------------------
def _matmul_kernel(x_ref, w_ref, b_ref, *rest, act, has_res):
    if has_res:
        res_ref, o_ref, acc_ref = rest
    else:
        o_ref, acc_ref = rest
        res_ref = None
    k = pl.program_id(2)

    @pl.when(k == 0)
    def _():
        acc_ref[...] = jnp.zeros_like(acc_ref)

    acc_ref[...] += jnp.dot(x_ref[...], w_ref[...],
                            preferred_element_type=jnp.float32)

    @pl.when(k == pl.num_programs(2) - 1)
    def _():
        r = acc_ref[...] + b_ref[...]
        if has_res:
            r = r + res_ref[...].astype(jnp.float32)
        if act == "relu":
            r = jnp.maximum(r, 0.0)
        elif act == "sigmoid":
            r = jax.nn.sigmoid(r)
        o_ref[...] = r.astype(o_ref.dtype)


@functools.lru_cache(maxsize=None)
def _get_matmul_call(Mp, Kp, Np, tm, tk, tn, act, has_res, out_dtype):
    kernel = functools.partial(_matmul_kernel, act=act, has_res=has_res)
    in_specs = [
        pl.BlockSpec((tm, tk), lambda i, j, k: (i, k)),
        pl.BlockSpec((tk, tn), lambda i, j, k: (k, j)),
        pl.BlockSpec((1, tn), lambda i, j, k: (0, j)),
    ]
    if has_res:
        in_specs.append(pl.BlockSpec((tm, tn), lambda i, j, k: (i, j)))
    return pl.pallas_call(
        kernel,
        out_shape=jax.ShapeDtypeStruct((Mp, Np), out_dtype),
        grid_spec=pltpu.PrefetchScalarGridSpec(
            num_scalar_prefetch=0,
            grid=(Mp // tm, Np // tn, Kp // tk),
            in_specs=in_specs,
            out_specs=pl.BlockSpec((tm, tn), lambda i, j, k: (i, j)),
            scratch_shapes=[pltpu.VMEM((tm, tn), jnp.float32)],
        ),
        compiler_params=pltpu.CompilerParams(
            dimension_semantics=("parallel", "parallel", "arbitrary"),
            vmem_limit_bytes=32 * 1024 * 1024),
    )


def _pick_tiles(M, K, N):
    """Generation-aware tiles: big K blocks, 512-lane outputs when M is tiny."""
    if M >= 1024:
        Mp, tm = _round_up(M, 512), 512
    elif M >= 256:
        Mp, tm = _round_up(M, 256), 256
    else:
        Mp = _round_up(M, 8)
        tm = Mp
    Np = _round_up(N, 128)
    if Mp <= 64 and Np % 512 == 0:
        tn = 512
    elif Np % 256 == 0:
        tn = 256
    else:
        tn = 128
    Kp = _round_up(K, 128)
    if Kp <= 4608:
        tk = Kp
    else:
        s = 2
        while not (Kp % s == 0 and (Kp // s) % 128 == 0 and Kp // s <= 4608):
            s += 1
        tk = Kp // s
    return Mp, Kp, Np, tm, tk, tn


def fused_matmul(x, w, b, act="none", residual=None, out_dtype=jnp.bfloat16):
    """out = act(x @ w + b [+ residual]); bf16 operands, f32 accumulation."""
    M, K = x.shape
    _, N = w.shape
    Mp, Kp, Np, tm, tk, tn = _pick_tiles(M, K, N)
    xp = jnp.pad(x.astype(jnp.bfloat16), ((0, Mp - M), (0, Kp - K)))
    wp = jnp.pad(w.astype(jnp.bfloat16), ((0, Kp - K), (0, Np - N)))
    bp = jnp.pad(b.astype(jnp.float32).reshape(1, -1), ((0, 0), (0, Np - N)))
    args = [xp, wp, bp]
    if residual is not None:
        args.append(jnp.pad(residual.astype(jnp.bfloat16),
                            ((0, Mp - M), (0, Np - N))))
    call = _get_matmul_call(Mp, Kp, Np, tm, tk, tn, act,
                            residual is not None, out_dtype)
    return call(*args)[:M, :N]


def _absdiff_kernel(x_ref, y_ref, o_ref):
    o_ref[...] = jnp.abs(x_ref[...] - y_ref[...])


@functools.lru_cache(maxsize=None)
def _get_absdiff_fn(shape, dtype_name):
    def fn(x, y):
        n = x.size
        npad = _round_up(n, 1024)
        xf = jnp.pad(x.reshape(-1), (0, npad - n)).reshape(-1, 128)
        yf = jnp.pad(y.reshape(-1), (0, npad - n)).reshape(-1, 128)
        out = pl.pallas_call(
            _absdiff_kernel,
            out_shape=jax.ShapeDtypeStruct(xf.shape, xf.dtype))(xf, yf)
        return out.reshape(-1)[:n].reshape(x.shape)
    return jax.jit(fn)


def abs_diff(x, y):
    return _get_absdiff_fn(tuple(x.shape), str(x.dtype))(x, y)


def _max9_kernel(x_ref, o_ref):
    r = x_ref[0]
    for i in range(1, 9):
        r = jnp.maximum(r, x_ref[i])
    o_ref[...] = r


@functools.lru_cache(maxsize=None)
def _get_pool_fn(shape, dtype_name):
    def fn(x):
        N, H, W, C = x.shape
        xp = jnp.pad(x, ((0, 0), (1, 1), (1, 1), (0, 0)),
                     constant_values=-jnp.inf)
        Ho = (H + 2 - 3) // 2 + 1
        Wo = (W + 2 - 3) // 2 + 1
        slices = [xp[:, i:i + 2 * (Ho - 1) + 1:2, j:j + 2 * (Wo - 1) + 1:2, :]
                  for i in range(3) for j in range(3)]
        stack = jnp.stack(slices, axis=0).reshape(9, -1)
        n = stack.shape[1]
        npad = _round_up(n, 1024)
        stack = jnp.pad(stack, ((0, 0), (0, npad - n)),
                        constant_values=-jnp.inf).reshape(9, -1, 128)
        out = pl.pallas_call(
            _max9_kernel,
            out_shape=jax.ShapeDtypeStruct(stack.shape[1:], stack.dtype))(stack)
        return out.reshape(-1)[:n].reshape(N, Ho, Wo, C)
    return jax.jit(fn)


def maxpool_3x3_s2_p1(x):
    return _get_pool_fn(tuple(x.shape), str(x.dtype))(x)


# --------------------------------------------------------------------------
# im2col glue (patch extraction stays in XLA, fused inside each conv's jit)
# --------------------------------------------------------------------------
def _im2col(x, k, stride, pad):
    N, H, W, C = x.shape
    if pad > 0:
        x = jnp.pad(x, ((0, 0), (pad, pad), (pad, pad), (0, 0)))
    Hp, Wp = H + 2 * pad, W + 2 * pad
    Ho = (Hp - k) // stride + 1
    Wo = (Wp - k) // stride + 1
    if k == 1:
        xs = x[:, ::stride, ::stride, :]
        return xs.reshape(N * Ho * Wo, C), (N, Ho, Wo)
    cols = []
    for i in range(k):
        for j in range(k):
            cols.append(x[:, i:i + stride * (Ho - 1) + 1:stride,
                          j:j + stride * (Wo - 1) + 1:stride, :])
    patches = jnp.stack(cols, axis=3)                 # (N,Ho,Wo,k*k,C)
    return patches.reshape(N * Ho * Wo, k * k * C), (N, Ho, Wo)


# --------------------------------------------------------------------------
# Cached per-signature jitted wrappers (one executable per unique conv shape)
# --------------------------------------------------------------------------
@functools.lru_cache(maxsize=None)
def _get_conv_fn(xshape, wshape, k, stride, pad, act, has_res, out_dtype):
    del wshape  # part of the cache key only

    def fn(x, w, b, *res):
        N, H, W, C = x.shape
        kk, pd = k, pad
        if H == 1 and W == 1 and k == 3 and stride == 1 and pad == 1:
            # 3x3 conv (pad 1) on a 1x1 map: only the centre tap touches real
            # data (the 8 outer taps hit zero padding) -> exact 1x1 conv.
            w = w[4 * C:5 * C]
            kk, pd = 1, 0
        patches, (n, Ho, Wo) = _im2col(x, kk, stride, pd)
        r = res[0].reshape(n * Ho * Wo, -1) if has_res else None
        y = fused_matmul(patches, w, b, act=act, residual=r,
                         out_dtype=out_dtype)
        return y.reshape(n, Ho, Wo, -1)

    return jax.jit(fn)


def _apply_conv(x, p, stride, pad, act, residual=None, out_dtype=jnp.bfloat16):
    fn = _get_conv_fn(tuple(x.shape), tuple(p["w"].shape), p["k"], stride, pad,
                      act, residual is not None, out_dtype)
    args = (x, p["w"], p["b"]) + ((residual,) if residual is not None else ())
    return fn(*args)


@functools.lru_cache(maxsize=None)
def _get_upconv_fn(xshape, wshape):
    del wshape

    def fn(x, w, b):
        N, H, W, C = x.shape
        y = fused_matmul(x.reshape(N * H * W, C), w, b, act="none",
                         out_dtype=jnp.bfloat16)
        cout = y.shape[-1] // 4
        y = y.reshape(N, H, W, 2, 2, cout).transpose(0, 1, 3, 2, 4, 5)
        return y.reshape(N, 2 * H, 2 * W, cout)

    return jax.jit(fn)


def _apply_upconv(x, p):
    return _get_upconv_fn(tuple(x.shape), tuple(p["w"].shape))(x, p["w"], p["b"])


# --------------------------------------------------------------------------
# Deterministic parameter construction (synthetic weights, NumPy -> bf16)
# --------------------------------------------------------------------------
class _Init:
    def __init__(self, seed=0):
        self.rng = np.random.default_rng(seed)

    def normal(self, shape, std=1.0):
        return (std * self.rng.standard_normal(shape, dtype=np.float32))


def _make_conv(init, cin, cout, k, mode="bn"):
    std = math.sqrt(2.0 / (cin * k * k))
    w = init.normal((k * k * cin, cout), std)
    if mode == "bn":          # Conv followed by eval-mode BN, folded
        scale = 1.0 + 0.05 * init.normal((cout,))
    else:                     # plain conv + bias
        scale = np.ones((cout,), np.float32)
    shift = 0.05 * init.normal((cout,))
    w = (w * scale[None, :]).astype(jnp.bfloat16)      # fold BN scale into W
    return {"w": jnp.asarray(w),
            "b": jnp.asarray(shift, dtype=jnp.float32),
            "k": k}


def _make_upconv(init, cin, cout):
    # ConvTranspose2d(k=2, s=2): weight stored as (cin, 4*cout); column block
    # (a*2+b) holds W[:, :, a, b].
    w = init.normal((cin, 4 * cout), math.sqrt(2.0 / cin)).astype(jnp.bfloat16)
    bias = 0.05 * init.normal((cout,))
    return {"w": jnp.asarray(w),
            "b": jnp.asarray(np.tile(bias, 4), dtype=jnp.float32)}


def _make_bottleneck(init, cin, width, stride):
    p = {"stride": stride,
         "conv1": _make_conv(init, cin, width, 1),
         "conv2": _make_conv(init, width, width, 3),
         "conv3": _make_conv(init, width, width * 4, 1)}
    if stride != 1 or cin != width * 4:
        p["downsample"] = _make_conv(init, cin, width * 4, 1)
    return p


def _make_bridge(init, cin, cout):
    return [_make_conv(init, cin, cout, 3), _make_conv(init, cout, cout, 3)]


def _make_upblock(init, in_c, out_c, up_in=None, up_out=None):
    up_in = in_c if up_in is None else up_in
    up_out = out_c if up_out is None else up_out
    return {"up": _make_upconv(init, up_in, up_out),
            "cb1": _make_conv(init, in_c, out_c, 3),
            "cb2": _make_conv(init, out_c, out_c, 3)}


def _make_decoder(init, chs, input_channel):
    dec = []
    for i in range(1, len(chs)):
        dec.append(_make_upblock(init, chs[-i], chs[-(i + 1)]))
    dec.append(_make_upblock(init, chs[0] // 2 + chs[0] // 4, chs[0] // 2,
                             up_in=chs[0], up_out=chs[0] // 2))
    dec.append(_make_upblock(init, chs[0] // 4 + input_channel, chs[0] // 4,
                             up_in=chs[0] // 2, up_out=chs[0] // 4))
    return dec


def make_params(input_channel=1, segment_o_channel=2, cd_o_channel=1, seed=0):
    init = _Init(seed)
    P = {}
    # replaced conv1 (Conv2d(input_channel, 64, k=7, s=2, p=3)) + resnet bn1
    P["conv1"] = _make_conv(init, input_channel, 64, 7, mode="bn")
    # ResNet-50 bottleneck stages: (blocks, width, first-stride)
    cfg = [(3, 64, 1), (4, 128, 2), (6, 256, 2), (3, 512, 2)]
    enc, cin = [], 64
    for blocks, width, stride in cfg:
        layer = []
        for b in range(blocks):
            layer.append(_make_bottleneck(init, cin if b == 0 else width * 4,
                                          width, stride if b == 0 else 1))
        cin = width * 4
        enc.append(layer)
    P["encoder"] = enc
    chs = [256, 512, 1024, 2048]            # encoded_channels
    P["segment_bridge"] = _make_bridge(init, chs[-1], chs[-1])
    P["segment_decoder"] = _make_decoder(init, chs, input_channel)
    P["segment_out"] = _make_conv(init, chs[0] // 4, segment_o_channel, 1,
                                  mode="bias")
    P["siamese_bridge"] = _make_bridge(init, chs[-1] * 2, chs[-1])
    P["siamese_decoder"] = _make_decoder(init, chs, input_channel)
    P["siamese_out"] = _make_conv(init, chs[0] // 4, cd_o_channel, 1,
                                  mode="bias")
    return P


# --------------------------------------------------------------------------
# Forward pass (glue around the Pallas kernels)
# --------------------------------------------------------------------------
def _apply_bottleneck(x, p):
    idt = x
    out = _apply_conv(x, p["conv1"], 1, 0, "relu")
    out = _apply_conv(out, p["conv2"], p["stride"], 1, "relu")
    if "downsample" in p:
        idt = _apply_conv(x, p["downsample"], p["stride"], 0, "none")
    return _apply_conv(out, p["conv3"], 1, 0, "relu", residual=idt)


def _apply_bridge(x, bp):
    for cp in bp:
        x = _apply_conv(x, cp, 1, 1, "relu")
    return x


def _apply_upblock(x, skip, p):
    x = _apply_upconv(x, p["up"])
    x = jnp.concatenate([x, skip.astype(jnp.bfloat16)], axis=-1)
    x = _apply_conv(x, p["cb1"], 1, 1, "relu")
    x = _apply_conv(x, p["cb2"], 1, 1, "relu")
    return x


def _encode(x, P):
    pools = {"layer_0": x}
    x1 = _apply_conv(x, P["conv1"], 2, 3, "relu")
    pools["layer_1"] = x1
    x2 = maxpool_3x3_s2_p1(x1)
    for li, layer in enumerate(P["encoder"], 2):
        for blk in layer:
            x2 = _apply_bottleneck(x2, blk)
        if li != 5:
            pools[f"layer_{li}"] = x2
    return x2, pools


def _decode(x, pools, decoder):
    for i, blk in enumerate(decoder, 1):
        x = _apply_upblock(x, pools[f"layer_{5 - i}"], blk)
    return x


def _segment_forward(x, P):
    enc, pools = _encode(x, P)
    a = _apply_bridge(enc, P["segment_bridge"])
    a = _decode(a, pools, P["segment_decoder"])
    a = _apply_conv(a, P["segment_out"], 1, 0, "sigmoid",
                    out_dtype=jnp.float32)
    pools["layer_0"] = a[..., 0:1].astype(jnp.bfloat16)
    return a, enc, pools


def _siamese_forward(ex, ey, px, py, P):
    a = jnp.concatenate([ex, ey], axis=-1)
    a = _apply_bridge(a, P["siamese_bridge"])
    fused = {k: abs_diff(px[k], py[k])
             for k in ("layer_4", "layer_3", "layer_2", "layer_1", "layer_0")}
    a = _decode(a, fused, P["siamese_decoder"])
    a = _apply_conv(a, P["siamese_out"], 1, 0, "none", out_dtype=jnp.float32)
    # nn.Softmax() picks the channel dim for 4-D input; channels-last here.
    return jax.nn.softmax(a, axis=-1)


def forward(x_nchw, y_nchw, P):
    B = x_nchw.shape[0]
    # Batch the two streams through the encoder / segment decoder in one pass.
    xy = jnp.concatenate([x_nchw, y_nchw], axis=0)
    xy = jnp.transpose(xy, (0, 2, 3, 1)).astype(jnp.bfloat16)
    a, enc, pools = _segment_forward(xy, P)
    ax, ay = a[:B], a[B:]
    ex, ey = enc[:B], enc[B:]
    px = {k: v[:B] for k, v in pools.items()}
    py = {k: v[B:] for k, v in pools.items()}
    cm = _siamese_forward(ex, ey, px, py, P)
    to_nchw = lambda t: jnp.transpose(t, (0, 3, 1, 2)).astype(jnp.float32)
    return {"cm": to_nchw(cm), "x": to_nchw(ax), "y": to_nchw(ay)}


# --------------------------------------------------------------------------
if __name__ == "__main__":
    key = jax.random.PRNGKey(0)
    kx, ky = jax.random.split(key)
    # input_channel must be 1 for the torch forward() to be shape-consistent
    # (pools['layer_0'] is overwritten with a 1-channel segmentation slice).
    # 32x32 is the smallest spatial size the 5-level architecture admits.
    B, C, H, W = 2, 1, 32, 32
    x = jax.random.normal(kx, (B, C, H, W), jnp.float32)
    y = jax.random.normal(ky, (B, C, H, W), jnp.float32)

    params = make_params(input_channel=C, segment_o_channel=2, cd_o_channel=1)
    out = forward(x, y, params)
    out = jax.block_until_ready(out)

    assert out["cm"].shape == (B, 1, H, W)
    assert out["x"].shape == (B, 2, H, W)
    assert out["y"].shape == (B, 2, H, W)
    assert all(bool(jnp.all(jnp.isfinite(v))) for v in out.values())
    print("KERNEL_OK")
</pallas_src>

<mosaic_0001>
module attributes {stable_mosaic.version = 11 : i64} {
  func.func @_matmul_kernel(%arg0: i32, %arg1: i32, %arg2: i32, %arg3: memref<512x128xbf16, #tpu.memory_space<vmem>>, %arg4: memref<128x128xbf16, #tpu.memory_space<vmem>>, %arg5: memref<1x128xf32, #tpu.memory_space<vmem>>, %arg6: memref<512x128xbf16, #tpu.memory_space<vmem>>, %arg7: memref<512x128xf32, #tpu.memory_space<vmem>>) attributes {dimension_semantics = [#tpu.dimension_semantics<parallel>, #tpu.dimension_semantics<parallel>, #tpu.dimension_semantics<arbitrary>], iteration_bounds = array<i64: 2, 1, 1>, scalar_prefetch = 0 : i64, scratch_operands = 1 : i64, tpu.core_type = #tpu.core_type<tc>, window_params = [{transform_indices = @transform_0, window_bounds = array<i64: 512, 128>}, {transform_indices = @transform_1, window_bounds = array<i64: 128, 128>}, {transform_indices = @transform_2, window_bounds = array<i64: 1, 128>}, {transform_indices = @transform_3, window_bounds = array<i64: 512, 128>}]} {
    %c0_i32 = arith.constant 0 : i32
    %0 = arith.cmpi eq, %arg2, %c0_i32 : i32
    %1 = arith.extui %0 : i1 to i32
    %c0_i32_0 = arith.constant 0 : i32
    %2 = arith.cmpi ne, %1, %c0_i32_0 : i32
    scf.if %2 {
      %cst_10 = arith.constant 0.000000e+00 : f32
      %12 = vector.broadcast %cst_10 : f32 to vector<512x128xf32>
      %c0_11 = arith.constant 0 : index
      %c0_12 = arith.constant 0 : index
      %13 = vector.load %arg7[%c0_11, %c0_12] : memref<512x128xf32, #tpu.memory_space<vmem>>, vector<512x128xf32>
      tpu.vector_store %arg7[%c0_11, %c0_12], %12 {strides = array<i32>} : memref<512x128xf32, #tpu.memory_space<vmem>>, vector<512x128xf32>,
    } else {
    }
    %c0 = arith.constant 0 : index
    %c0_1 = arith.constant 0 : index
    %3 = vector.load %arg7[%c0, %c0_1] : memref<512x128xf32, #tpu.memory_space<vmem>>, vector<512x128xf32>
    %c0_2 = arith.constant 0 : index
    %c0_3 = arith.constant 0 : index
    %4 = vector.load %arg3[%c0_2, %c0_3] : memref<512x128xbf16, #tpu.memory_space<vmem>>, vector<512x128xbf16>
    %c0_4 = arith.constant 0 : index
    %c0_5 = arith.constant 0 : index
    %5 = vector.load %arg4[%c0_4, %c0_5] : memref<128x128xbf16, #tpu.memory_space<vmem>>, vector<128x128xbf16>
    %cst = arith.constant dense<0.000000e+00> : vector<512x128xf32>
    %6 = tpu.matmul %4, %5, %cst {dimension_numbers = #tpu.dot_dimension_numbers<[1], [0], [0], [1], [0, 0, 1, 1], [], []>} : vector<512x128xbf16>, vector<128x128xbf16>, vector<512x128xf32> -> vector<512x128xf32>
    %7 = arith.addf %3, %6 : vector<512x128xf32>
    %c0_6 = arith.constant 0 : index
    %c0_7 = arith.constant 0 : index
    %8 = vector.load %arg7[%c0_6, %c0_7] : memref<512x128xf32, #tpu.memory_space<vmem>>, vector<512x128xf32>
    tpu.vector_store %arg7[%c0_6, %c0_7], %7 {strides = array<i32>} : memref<512x128xf32, #tpu.memory_space<vmem>>, vector<512x128xf32>,
    %c0_i32_8 = arith.constant 0 : i32
    %9 = arith.cmpi eq, %arg2, %c0_i32_8 : i32
    %10 = arith.extui %9 : i1 to i32
    %c0_i32_9 = arith.constant 0 : i32
    %11 = arith.cmpi ne, %10, %c0_i32_9 : i32
    scf.if %11 {
      %c0_10 = arith.constant 0 : index
      %c0_11 = arith.constant 0 : index
      %12 = vector.load %arg7[%c0_10, %c0_11] : memref<512x128xf32, #tpu.memory_space<vmem>>, vector<512x128xf32>
      %c0_12 = arith.constant 0 : index
      %c0_13 = arith.constant 0 : index
      %13 = vector.load %arg5[%c0_12, %c0_13] : memref<1x128xf32, #tpu.memory_space<vmem>>, vector<1x128xf32>
      %14 = vector.broadcast %13 : vector<1x128xf32> to vector<512x128xf32>
      %15 = arith.addf %12, %14 : vector<512x128xf32>
      %cst_14 = arith.constant 0.000000e+00 : f32
      %16 = vector.broadcast %cst_14 : f32 to vector<512x128xf32>
      %17 = arith.maximumf %15, %16 : vector<512x128xf32>
      %18 = arith.truncf %17 : vector<512x128xf32> to vector<512x128xbf16>
      %c0_15 = arith.constant 0 : index
      %c0_16 = arith.constant 0 : index
      %19 = vector.load %arg6[%c0_15, %c0_16] : memref<512x128xbf16, #tpu.memory_space<vmem>>, vector<512x128xbf16>
      tpu.vector_store %arg6[%c0_15, %c0_16], %18 {strides = array<i32>} : memref<512x128xbf16, #tpu.memory_space<vmem>>, vector<512x128xbf16>,
    } else {
    }
    return
  }
  func.func @transform_0(%arg0: i32, %arg1: i32, %arg2: i32) -> (i32, i32) {
    %c0_i32 = arith.constant 0 : i32
    return %arg0, %arg2 : i32, i32
  }
  func.func @transform_1(%arg0: i32, %arg1: i32, %arg2: i32) -> (i32, i32) {
    %c0_i32 = arith.constant 0 : i32
    return %arg2, %arg1 : i32, i32
  }
  func.func @transform_2(%arg0: i32, %arg1: i32, %arg2: i32) -> (i32, i32) {
    %c0_i32 = arith.constant 0 : i32
    %c0_i32_0 = arith.constant 0 : i32
    return %c0_i32, %arg1 : i32, i32
  }
  func.func @transform_3(%arg0: i32, %arg1: i32, %arg2: i32) -> (i32, i32) {
    %c0_i32 = arith.constant 0 : i32
    return %arg0, %arg1 : i32, i32
  }
}

</mosaic_0001>

<llo_original>
// kernel: fn.1
$region0: #{fn.1}
  #allocation0 [shape = 'u32[]', space=smem, size = 0x4, offset = 0x4, fixed_abs, tag = 'smem constant byte address 0x4 - core index']
  #allocation1 [shape = 'u32[72,128]{1,0:T(1,128)}', space=vmem, size = 0x9000, scoped, tag = 'internal scratch']
  #allocation2 [shape = 'f32[512,128]{1,0:T(8,128)}', space=vmem, size = 0x40000, scoped, tag = 'scratch operand']
  %s0 = inlined_call_operand.vmem [shape: bf16[1024,128], index: 0, kind: input, shape index: {}]
  %s1 = inlined_call_operand.vmem [shape: bf16[128,128], index: 1, kind: input, shape index: {}]
  %s2 = inlined_call_operand.vmem [shape: f32[1,128], index: 2, kind: input, shape index: {}]
  %s3 = inlined_call_operand.hbm [shape: bf16[1024,128], index: 3, kind: output, shape index: {}]
  %s4 = sld [smem:[#allocation0]]
  $region53: #{fn.1} parent=0
    _
  %s6 = ssub.s32 1, %s4
  %s7 = scalar_select 0, %s6, %s4
  $region1: #{fn.1} parent=0
    #allocation3 [shape = 'u8[262144]{0}', space=vmem, size = 0x40000, scoped, tag = 'output window, operand 0']
    #allocation4 [shape = 's32[2]{0}', space=sflag, size = 0x8, scoped, tag = 'scoped memory for fn.1']
    %8 = vsyncpa [#allocation4], 0
    %s9 = scalar_lea.sflag [#allocation4], 1
    %10 = vsyncpa %s9, 0
    loop: start=0, step=1, limit=4
    $region2: #{fn.1} parent=1 // loop_pre_header
      _
    $region3: #{fn.1} parent=1 // loop_header
      %s12 = sphi 0, %s16
      %p13 = scmp.ge.s32.totalorder %s12, 4
      %s19 = sphi 0, %s38
      %s20 = sphi 0, %s34
      %s21 = sphi 0, %s30
      %s22 = sphi 0, %s19
      %s23 = sphi 0, %s20
      %s24 = sphi 0, %s21
      %s25 = sphi 0, %s22
      %s26 = sphi 0, %s23
      %s27 = sphi 0, %s24
      %s43 = sphi 0, %s45
      %s46 = sphi 0, %s43
      %s47 = sphi 0, %s46
      %s63 = sphi 0, %s47
      %s71 = sphi 0, %s73
      %s74 = sphi 0, %s71
      %s75 = sphi 0, %s74
      %s91 = sphi 0, %s75
      %s97 = sphi 0, %s99
      %s100 = sphi 0, %s97
      %s101 = sphi 0, %s100
      %s117 = sphi 0, %s101
      %s125 = sphi 0, %s127
      %s128 = sphi 0, %s125
      %s129 = sphi 0, %s128
      %s145 = sphi 0, %s129
    $region4: #{fn.1} parent=1 // loop_header_branch
      %15 = sbr.rel (%p13) target = $region8
    $region5: #{fn.1} parent=1 // loop_body
      %s17 = ssub.s32 %s12, 1
      %s18 = ssub.s32 %s12, 2
      %s28 = sadd.s32 1, %s21
      %p29 = scmp.ge.s32.totalorder %s28, 1
      %s30 = scalar_select %p29, 0, %s28
      %s31 = sadd.s32 1, %s20
      %s32 = scalar_select %p29, %s31, %s20
      %p33 = scmp.ge.s32.totalorder %s32, 1
      %s34 = scalar_select %p33, 0, %s32
      %s35 = sadd.s32 1, %s19
      %s36 = scalar_select %p33, %s35, %s19
      %p37 = scmp.ge.s32.totalorder %s36, 2
      %s38 = scalar_select %p37, 0, %s36
      %s39 = ssub.s32 %s19, %s38
      %s40 = ssub.s32 %s21, %s30
      %s41 = sor.u32 %s39, %s40
      %p42 = scmp.eq.s32.totalorder %s41, 0
      %s44 = sadd.s32 %s43, 1
      %s45 = scalar_select %p42, %s43, %s44
      %p48 = pneg %p42
      %p49 = scmp.eq.s32.totalorder %s12, 1
      %p50 = por %p48, %p49
      %p51 = scmp.ne.s32.totalorder %s43, %s46
      %p52 = scmp.eq.s32.totalorder %s12, 0
      %p53 = por %p51, %p52
      %p54 = scmp.ne.s32.totalorder %s43, %s46
      %p55 = scmp.eq.s32.totalorder %s17, 1
      %p56 = por %p54, %p55
      %p57 = scmp.ne.s32.totalorder %s46, %s47
      %p58 = scmp.eq.s32.totalorder %s17, 0
      %p59 = por %p57, %p58
      %p60 = scmp.ne.s32.totalorder %s46, %s47
      %p61 = scmp.eq.s32.totalorder %s18, 1
      %p62 = por %p60, %p61
      %p64 = scmp.ne.s32.totalorder %s47, %s63
      %p65 = scmp.eq.s32.totalorder %s18, 0
      %p66 = por %p64, %p65
      %s67 = ssub.s32 %s21, %s30
      %s68 = ssub.s32 %s20, %s34
      %s69 = sor.u32 %s67, %s68
      %p70 = scmp.eq.s32.totalorder %s69, 0
      %s72 = sadd.s32 %s71, 1
      %s73 = scalar_select %p70, %s71, %s72
      %p76 = pneg %p70
      %p77 = scmp.eq.s32.totalorder %s12, 1
      %p78 = por %p76, %p77
      %p79 = scmp.ne.s32.totalorder %s71, %s74
      %p80 = scmp.eq.s32.totalorder %s12, 0
      %p81 = por %p79, %p80
      %p82 = scmp.ne.s32.totalorder %s71, %s74
      %p83 = scmp.eq.s32.totalorder %s17, 1
      %p84 = por %p82, %p83
      %p85 = scmp.ne.s32.totalorder %s74, %s75
      %p86 = scmp.eq.s32.totalorder %s17, 0
      %p87 = por %p85, %p86
      %p88 = scmp.ne.s32.totalorder %s74, %s75
      %p89 = scmp.eq.s32.totalorder %s18, 1
      %p90 = por %p88, %p89
      %p92 = scmp.ne.s32.totalorder %s75, %s91
      %p93 = scmp.eq.s32.totalorder %s18, 0
      %p94 = por %p92, %p93
      %s95 = ssub.s32 %s20, %s34
      %p96 = scmp.eq.s32.totalorder %s95, 0
      %s98 = sadd.s32 %s97, 1
      %s99 = scalar_select %p96, %s97, %s98
      %p102 = pneg %p96
      %p103 = scmp.eq.s32.totalorder %s12, 1
      %p104 = por %p102, %p103
      %p105 = scmp.ne.s32.totalorder %s97, %s100
      %p106 = scmp.eq.s32.totalorder %s12, 0
      %p107 = por %p105, %p106
      %p108 = scmp.ne.s32.totalorder %s97, %s100
      %p109 = scmp.eq.s32.totalorder %s17, 1
      %p110 = por %p108, %p109
      %p111 = scmp.ne.s32.totalorder %s100, %s101
      %p112 = scmp.eq.s32.totalorder %s17, 0
      %p113 = por %p111, %p112
      %p114 = scmp.ne.s32.totalorder %s100, %s101
      %p115 = scmp.eq.s32.totalorder %s18, 1
      %p116 = por %p114, %p115
      %p118 = scmp.ne.s32.totalorder %s101, %s117
      %p119 = scmp.eq.s32.totalorder %s18, 0
      %p120 = por %p118, %p119
      %s121 = ssub.s32 %s19, %s38
      %s122 = ssub.s32 %s20, %s34
      %s123 = sor.u32 %s121, %s122
      %p124 = scmp.eq.s32.totalorder %s123, 0
      %s126 = sadd.s32 %s125, 1
      %s127 = scalar_select %p124, %s125, %s126
      %p130 = pneg %p124
      %p131 = scmp.eq.s32.totalorder %s12, 1
      %p132 = por %p130, %p131
      %p133 = scmp.ne.s32.totalorder %s125, %s128
      %p134 = scmp.eq.s32.totalorder %s12, 0
      %p135 = por %p133, %p134
      %p136 = scmp.ne.s32.totalorder %s125, %s128
      %p137 = scmp.eq.s32.totalorder %s17, 1
      %p138 = por %p136, %p137
      %p139 = scmp.ne.s32.totalorder %s128, %s129
      %p140 = scmp.eq.s32.totalorder %s17, 0
      %p141 = por %p139, %p140
      %p142 = scmp.ne.s32.totalorder %s128, %s129
      %p143 = scmp.eq.s32.totalorder %s18, 1
      %p144 = por %p142, %p143
      %p146 = scmp.ne.s32.totalorder %s129, %s145
      %p147 = scmp.eq.s32.totalorder %s18, 0
      %p148 = por %p146, %p147
      %p149 = scmp.le.s32.totalorder 1, %s12
      %p150 = scmp.lt.s32.totalorder %s12, 3
      %p151 = pnand %p149, %p150
      %p152 = pneg %p151
      // Predicated region
      $region9: #{fn.1} parent=5 // pred_check
        _
      $region10: #{fn.1} parent=5 // pred_check_branch
        %154 = sbr.rel (%p151) target = $region12
      $region11: #{fn.1} parent=5 // pred_region
        %s155 = ssub.s32 %s12, 1
        // Predicated region
        $region13: #{fn.1} parent=11 // pred_check
          %p156 = pneg %p87
        $region14: #{fn.1} parent=11 // pred_check_branch
          %158 = sbr.rel (%p156) target = $region16
        $region15: #{fn.1} parent=11 // pred_region
          %s159 = smul.u32 16, %s24
          %p160 = scmp.lt.s32.totalorder %s159, 15
          %s161 = scalar_select %p160, %s159, 15
          %p162 = scmp.lt.s32.totalorder %s23, 0
          %s163 = scalar_select %p162, %s23, 0
          %s164 = sadd.s32 %s163, %s161
          %s165 = smul.addr %s164, 4
          %s166 = scalar_lea.vmem %s1, %s165
          %s167 = smul.u32 16, %s24
        $region16: #{fn.1} parent=11 // pred_fallthru
          _
        // Predicated region
        $region17: #{fn.1} parent=11 // pred_check
          %p168 = pneg %p113
        $region18: #{fn.1} parent=11 // pred_check_branch
          %170 = sbr.rel (%p168) target = $region20
        $region19: #{fn.1} parent=11 // pred_region
          %p171 = scmp.lt.s32.totalorder %s23, 0
          %s172 = scalar_select %p171, %s23, 0
          %s173 = scalar_lea.vmem %s2, %s172
        $region20: #{fn.1} parent=11 // pred_fallthru
          _
      $region12: #{fn.1} parent=5 // pred_fallthru
        _
      %p174 = scmp.lt.s32.totalorder %s12, 2
      // Predicated region
      $region21: #{fn.1} parent=5 // pred_check
        %p175 = pneg %p174
      $region22: #{fn.1} parent=5 // pred_check_branch
        %177 = sbr.rel (%p175) target = $region24
      $region23: #{fn.1} parent=5 // pred_region
        // Predicated region
        $region25: #{fn.1} parent=23 // pred_check
          %p178 = pneg %p53
        $region26: #{fn.1} parent=23 // pred_check_branch
          %180 = sbr.rel (%p178) target = $region28
        $region27: #{fn.1} parent=23 // pred_region
          %s181 = smul.u32 64, %s19
          %p182 = scmp.lt.s32.totalorder %s181, 127
          %s183 = scalar_select %p182, %s181, 127
          %p184 = scmp.lt.s32.totalorder %s21, 0
          %s185 = scalar_select %p184, %s21, 0
          %s186 = sadd.s32 %s185, %s183
          %s187 = smul.addr %s186, 4
          %s188 = scalar_lea.vmem %s0, %s187
          %s189 = smul.u32 64, %s19
        $region28: #{fn.1} parent=23 // pred_fallthru
          _
      $region24: #{fn.1} parent=5 // pred_fallthru
        _
      %p190 = scmp.le.s32.totalorder 1, %s12
      %p191 = scmp.lt.s32.totalorder %s12, 3
      %p192 = pnand %p190, %p191
      %p193 = pneg %p192
      // Predicated region
      $region29: #{fn.1} parent=5 // pred_check
        _
      $region30: #{fn.1} parent=5 // pred_check_branch
        %195 = sbr.rel (%p192) target = $region32
      $region31: #{fn.1} parent=5 // pred_region
        %s196 = ssub.s32 %s12, 1
        %s197 = smul.u32 64, %s22
        %p198 = scmp.lt.s32.totalorder %s197, 127
        %s199 = scalar_select %p198, %s197, 127
        %p200 = scmp.lt.s32.totalorder %s24, 0
        %s201 = scalar_select %p200, %s24, 0
        %s202 = sadd.s32 %s201, %s199
        %s203 = smul.addr %s202, 4
        %s204 = scalar_lea.vmem %s0, %s203
        %p205 = pneg %p59
        %p206 = pneg %p56
        %s207 = smul.u32 16, %s24
        %p208 = scmp.lt.s32.totalorder %s207, 15
        %s209 = scalar_select %p208, %s207, 15
        %p210 = scmp.lt.s32.totalorder %s23, 0
        %s211 = scalar_select %p210, %s23, 0
        %s212 = sadd.s32 %s211, %s209
        %s213 = smul.addr %s212, 4
        %s214 = scalar_lea.vmem %s1, %s213
        %p215 = pneg %p87
        %p216 = pneg %p84
        %p217 = scmp.lt.s32.totalorder %s23, 0
        %s218 = scalar_select %p217, %s23, 0
        %s219 = scalar_lea.vmem %s2, %s218
        %p220 = pneg %p113
        %p221 = pneg %p110
        %p222 = pneg %p141
        %p223 = pneg %p138
        %s224 = sand.u32 %s128, 1
        %s225 = scalar_lea.sflag [#allocation4], %s224
        %s226 = sand.u32 %s128, 1
        %s227 = smul.addr %s226, 256
        %s228 = scalar_lea.vmem [#allocation3], %s227
        %s229 = smul.u32 64, %s22
        %p230 = scmp.lt.s32.totalorder %s229, 127
        %s231 = scalar_select %p230, %s229, 127
        %p232 = scmp.lt.s32.totalorder %s24, 0
        %s233 = scalar_select %p232, %s24, 0
        %s234 = sadd.s32 %s233, %s231
        %s235 = smul.addr %s234, 4
        %s236 = scalar_lea.vmem %s0, %s235
        %s237 = smul.u32 64, %s22
        %s238 = smul.u32 16, %s24
        %p239 = scmp.lt.s32.totalorder %s238, 15
        %s240 = scalar_select %p239, %s238, 15
        %p241 = scmp.lt.s32.totalorder %s23, 0
        %s242 = scalar_select %p241, %s23, 0
        %s243 = sadd.s32 %s242, %s240
        %s244 = smul.addr %s243, 4
        %s245 = scalar_lea.vmem %s1, %s244
        %s246 = smul.u32 16, %s24
        %p247 = scmp.lt.s32.totalorder %s23, 0
        %s248 = scalar_select %p247, %s23, 0
        %s249 = scalar_lea.vmem %s2, %s248
        %s250 = smul.u32 64, %s22
        %p251 = scmp.eq.s32.totalorder %s24, 0
        // Predicated region
        $region33: #{fn.1} parent=31 // pred_check
          %p252 = pneg %p251
        $region34: #{fn.1} parent=31 // pred_check_branch
          %254 = sbr.rel (%p252) target = $region36
        $region35: #{fn.1} parent=31 // pred_region
          %255 = vst [vmem:[#allocation2] sm:$0xff] 0.0
          %256 = vst [vmem:[#allocation2 + $0x8] sm:$0xff] 0.0
          %257 = vst [vmem:[#allocation2 + $0x10] sm:$0xff] 0.0
          %258 = vst [vmem:[#allocation2 + $0x18] sm:$0xff] 0.0
          %259 = vst [vmem:[#allocation2 + $0x20] sm:$0xff] 0.0
          %260 = vst [vmem:[#allocation2 + $0x28] sm:$0xff] 0.0
          %261 = vst [vmem:[#allocation2 + $0x30] sm:$0xff] 0.0
          %262 = vst [vmem:[#allocation2 + $0x38] sm:$0xff] 0.0
          %263 = vst [vmem:[#allocation2 + $0x40] sm:$0xff] 0.0
          %264 = vst [vmem:[#allocation2 + $0x48] sm:$0xff] 0.0
          %265 = vst [vmem:[#allocation2 + $0x50] sm:$0xff] 0.0
          %266 = vst [vmem:[#allocation2 + $0x58] sm:$0xff] 0.0
          %267 = vst [vmem:[#allocation2 + $0x60] sm:$0xff] 0.0
          %268 = vst [vmem:[#allocation2 + $0x68] sm:$0xff] 0.0
          %269 = vst [vmem:[#allocation2 + $0x70] sm:$0xff] 0.0
          %270 = vst [vmem:[#allocation2 + $0x78] sm:$0xff] 0.0
          %271 = vst [vmem:[#allocation2 + $0x80] sm:$0xff] 0.0
          %272 = vst [vmem:[#allocation2 + $0x88] sm:$0xff] 0.0
          %273 = vst [vmem:[#allocation2 + $0x90] sm:$0xff] 0.0
          %274 = vst [vmem:[#allocation2 + $0x98] sm:$0xff] 0.0
          %275 = vst [vmem:[#allocation2 + $0xa0] sm:$0xff] 0.0
          %276 = vst [vmem:[#allocation2 + $0xa8] sm:$0xff] 0.0
          %277 = vst [vmem:[#allocation2 + $0xb0] sm:$0xff] 0.0
          %278 = vst [vmem:[#allocation2 + $0xb8] sm:$0xff] 0.0
          %279 = vst [vmem:[#allocation2 + $0xc0] sm:$0xff] 0.0
          %280 = vst [vmem:[#allocation2 + $0xc8] sm:$0xff] 0.0
          %281 = vst [vmem:[#allocation2 + $0xd0] sm:$0xff] 0.0
          %282 = vst [vmem:[#allocation2 + $0xd8] sm:$0xff] 0.0
          %283 = vst [vmem:[#allocation2 + $0xe0] sm:$0xff] 0.0
          %284 = vst [vmem:[#allocation2 + $0xe8] sm:$0xff] 0.0
          %285 = vst [vmem:[#allocation2 + $0xf0] sm:$0xff] 0.0
          %286 = vst [vmem:[#allocation2 + $0xf8] sm:$0xff] 0.0
          %287 = vst [vmem:[#allocation2 + $0x100] sm:$0xff] 0.0
          %288 = vst [vmem:[#allocation2 + $0x108] sm:$0xff] 0.0
          %289 = vst [vmem:[#allocation2 + $0x110] sm:$0xff] 0.0
          %290 = vst [vmem:[#allocation2 + $0x118] sm:$0xff] 0.0
          %291 = vst [vmem:[#allocation2 + $0x120] sm:$0xff] 0.0
          %292 = vst [vmem:[#allocation2 + $0x128] sm:$0xff] 0.0
          %293 = vst [vmem:[#allocation2 + $0x130] sm:$0xff] 0.0
          %294 = vst [vmem:[#allocation2 + $0x138] sm:$0xff] 0.0
          %295 = vst [vmem:[#allocation2 + $0x140] sm:$0xff] 0.0
          %296 = vst [vmem:[#allocation2 + $0x148] sm:$0xff] 0.0
          %297 = vst [vmem:[#allocation2 + $0x150] sm:$0xff] 0.0
          %298 = vst [vmem:[#allocation2 + $0x158] sm:$0xff] 0.0
          %299 = vst [vmem:[#allocation2 + $0x160] sm:$0xff] 0.0
          %300 = vst [vmem:[#allocation2 + $0x168] sm:$0xff] 0.0
          %301 = vst [vmem:[#allocation2 + $0x170] sm:$0xff] 0.0
          %302 = vst [vmem:[#allocation2 + $0x178] sm:$0xff] 0.0
          %303 = vst [vmem:[#allocation2 + $0x180] sm:$0xff] 0.0
          %304 = vst [vmem:[#allocation2 + $0x188] sm:$0xff] 0.0
          %305 = vst [vmem:[#allocation2 + $0x190] sm:$0xff] 0.0
          %306 = vst [vmem:[#allocation2 + $0x198] sm:$0xff] 0.0
          %307 = vst [vmem:[#allocation2 + $0x1a0] sm:$0xff] 0.0
          %308 = vst [vmem:[#allocation2 + $0x1a8] sm:$0xff] 0.0
          %309 = vst [vmem:[#allocation2 + $0x1b0] sm:$0xff] 0.0
          %310 = vst [vmem:[#allocation2 + $0x1b8] sm:$0xff] 0.0
          %311 = vst [vmem:[#allocation2 + $0x1c0] sm:$0xff] 0.0
          %312 = vst [vmem:[#allocation2 + $0x1c8] sm:$0xff] 0.0
          %313 = vst [vmem:[#allocation2 + $0x1d0] sm:$0xff] 0.0
          %314 = vst [vmem:[#allocation2 + $0x1d8] sm:$0xff] 0.0
          %315 = vst [vmem:[#allocation2 + $0x1e0] sm:$0xff] 0.0
          %316 = vst [vmem:[#allocation2 + $0x1e8] sm:$0xff] 0.0
          %317 = vst [vmem:[#allocation2 + $0x1f0] sm:$0xff] 0.0
          %318 = vst [vmem:[#allocation2 + $0x1f8] sm:$0xff] 0.0
        $region36: #{fn.1} parent=31 // pred_fallthru
          _
        %v319 = vld [vmem:[#allocation2] sm:$0xff]
        %v320 = vld [vmem:[#allocation2 + $0x8] sm:$0xff]
        %v321 = vld [vmem:[#allocation2 + $0x10] sm:$0xff]
        %v322 = vld [vmem:[#allocation2 + $0x18] sm:$0xff]
        %v323 = vld [vmem:[#allocation2 + $0x20] sm:$0xff]
        %v324 = vld [vmem:[#allocation2 + $0x28] sm:$0xff]
        %v325 = vld [vmem:[#allocation2 + $0x30] sm:$0xff]
        %v326 = vld [vmem:[#allocation2 + $0x38] sm:$0xff]
        %v327 = vld [vmem:[#allocation2 + $0x40] sm:$0xff]
        %v328 = vld [vmem:[#allocation2 + $0x48] sm:$0xff]
        %v329 = vld [vmem:[#allocation2 + $0x50] sm:$0xff]
        %v330 = vld [vmem:[#allocation2 + $0x58] sm:$0xff]
        %v331 = vld [vmem:[#allocation2 + $0x60] sm:$0xff]
        %v332 = vld [vmem:[#allocation2 + $0x68] sm:$0xff]
        %v333 = vld [vmem:[#allocation2 + $0x70] sm:$0xff]
        %v334 = vld [vmem:[#allocation2 + $0x78] sm:$0xff]
        %v335 = vld [vmem:[#allocation2 + $0x80] sm:$0xff]
        %v336 = vld [vmem:[#allocation2 + $0x88] sm:$0xff]
        %v337 = vld [vmem:[#allocation2 + $0x90] sm:$0xff]
        %v338 = vld [vmem:[#allocation2 + $0x98] sm:$0xff]
        %v339 = vld [vmem:[#allocation2 + $0xa0] sm:$0xff]
        %v340 = vld [vmem:[#allocation2 + $0xa8] sm:$0xff]
        %v341 = vld [vmem:[#allocation2 + $0xb0] sm:$0xff]
        %v342 = vld [vmem:[#allocation2 + $0xb8] sm:$0xff]
        %v343 = vld [vmem:[#allocation2 + $0xc0] sm:$0xff]
        %v344 = vld [vmem:[#allocation2 + $0xc8] sm:$0xff]
        %v345 = vld [vmem:[#allocation2 + $0xd0] sm:$0xff]
        %v346 = vld [vmem:[#allocation2 + $0xd8] sm:$0xff]
        %v347 = vld [vmem:[#allocation2 + $0xe0] sm:$0xff]
        %v348 = vld [vmem:[#allocation2 + $0xe8] sm:$0xff]
        %v349 = vld [vmem:[#allocation2 + $0xf0] sm:$0xff]
        %v350 = vld [vmem:[#allocation2 + $0xf8] sm:$0xff]
        %v351 = vld [vmem:[#allocation2 + $0x100] sm:$0xff]
        %v352 = vld [vmem:[#allocation2 + $0x108] sm:$0xff]
        %v353 = vld [vmem:[#allocation2 + $0x110] sm:$0xff]
        %v354 = vld [vmem:[#allocation2 + $0x118] sm:$0xff]
        %v355 = vld [vmem:[#allocation2 + $0x120] sm:$0xff]
        %v356 = vld [vmem:[#allocation2 + $0x128] sm:$0xff]
        %v357 = vld [vmem:[#allocation2 + $0x130] sm:$0xff]
        %v358 = vld [vmem:[#allocation2 + $0x138] sm:$0xff]
        %v359 = vld [vmem:[#allocation2 + $0x140] sm:$0xff]
        %v360 = vld [vmem:[#allocation2 + $0x148] sm:$0xff]
        %v361 = vld [vmem:[#allocation2 + $0x150] sm:$0xff]
        %v362 = vld [vmem:[#allocation2 + $0x158] sm:$0xff]
        %v363 = vld [vmem:[#allocation2 + $0x160] sm:$0xff]
        %v364 = vld [vmem:[#allocation2 + $0x168] sm:$0xff]
        %v365 = vld [vmem:[#allocation2 + $0x170] sm:$0xff]
        %v366 = vld [vmem:[#allocation2 + $0x178] sm:$0xff]
        %v367 = vld [vmem:[#allocation2 + $0x180] sm:$0xff]
        %v368 = vld [vmem:[#allocation2 + $0x188] sm:$0xff]
        %v369 = vld [vmem:[#allocation2 + $0x190] sm:$0xff]
        %v370 = vld [vmem:[#allocation2 + $0x198] sm:$0xff]
        %v371 = vld [vmem:[#allocation2 + $0x1a0] sm:$0xff]
        %v372 = vld [vmem:[#allocation2 + $0x1a8] sm:$0xff]
        %v373 = vld [vmem:[#allocation2 + $0x1b0] sm:$0xff]
        %v374 = vld [vmem:[#allocation2 + $0x1b8] sm:$0xff]
        %v375 = vld [vmem:[#allocation2 + $0x1c0] sm:$0xff]
        %v376 = vld [vmem:[#allocation2 + $0x1c8] sm:$0xff]
        %v377 = vld [vmem:[#allocation2 + $0x1d0] sm:$0xff]
        %v378 = vld [vmem:[#allocation2 + $0x1d8] sm:$0xff]
        %v379 = vld [vmem:[#allocation2 + $0x1e0] sm:$0xff]
        %v380 = vld [vmem:[#allocation2 + $0x1e8] sm:$0xff]
        %v381 = vld [vmem:[#allocation2 + $0x1f0] sm:$0xff]
        %v382 = vld [vmem:[#allocation2 + $0x1f8] sm:$0xff]
        %v383 = vld [vmem:[%s236] sm:$0xf]
        %v384 = vld [vmem:[%s236 + $0x4] sm:$0xf]
        %v385 = vld [vmem:[%s236 + $0x8] sm:$0xf]
        %v386 = vld [vmem:[%s236 + $0xc] sm:$0xf]
        %v387 = vld [vmem:[%s236 + $0x10] sm:$0xf]
        %v388 = vld [vmem:[%s236 + $0x14] sm:$0xf]
        %v389 = vld [vmem:[%s236 + $0x18] sm:$0xf]
        %v390 = vld [vmem:[%s236 + $0x1c] sm:$0xf]
        %v391 = vld [vmem:[%s236 + $0x20] sm:$0xf]
        %v392 = vld [vmem:[%s236 + $0x24] sm:$0xf]
        %v393 = vld [vmem:[%s236 + $0x28] sm:$0xf]
        %v394 = vld [vmem:[%s236 + $0x2c] sm:$0xf]
        %v395 = vld [vmem:[%s236 + $0x30] sm:$0xf]
        %v396 = vld [vmem:[%s236 + $0x34] sm:$0xf]
        %v397 = vld [vmem:[%s236 + $0x38] sm:$0xf]
        %v398 = vld [vmem:[%s236 + $0x3c] sm:$0xf]
        %v399 = vld [vmem:[%s236 + $0x40] sm:$0xf]
        %v400 = vld [vmem:[%s236 + $0x44] sm:$0xf]
        %v401 = vld [vmem:[%s236 + $0x48] sm:$0xf]
        %v402 = vld [vmem:[%s236 + $0x4c] sm:$0xf]
        %v403 = vld [vmem:[%s236 + $0x50] sm:$0xf]
        %v404 = vld [vmem:[%s236 + $0x54] sm:$0xf]
        %v405 = vld [vmem:[%s236 + $0x58] sm:$0xf]
        %v406 = vld [vmem:[%s236 + $0x5c] sm:$0xf]
        %v407 = vld [vmem:[%s236 + $0x60] sm:$0xf]
        %v408 = vld [vmem:[%s236 + $0x64] sm:$0xf]
        %v409 = vld [vmem:[%s236 + $0x68] sm:$0xf]
        %v410 = vld [vmem:[%s236 + $0x6c] sm:$0xf]
        %v411 = vld [vmem:[%s236 + $0x70] sm:$0xf]
        %v412 = vld [vmem:[%s236 + $0x74] sm:$0xf]
        %v413 = vld [vmem:[%s236 + $0x78] sm:$0xf]
        %v414 = vld [vmem:[%s236 + $0x7c] sm:$0xf]
        %v415 = vld [vmem:[%s236 + $0x80] sm:$0xf]
        %v416 = vld [vmem:[%s236 + $0x84] sm:$0xf]
        %v417 = vld [vmem:[%s236 + $0x88] sm:$0xf]
        %v418 = vld [vmem:[%s236 + $0x8c] sm:$0xf]
        %v419 = vld [vmem:[%s236 + $0x90] sm:$0xf]
        %v420 = vld [vmem:[%s236 + $0x94] sm:$0xf]
        %v421 = vld [vmem:[%s236 + $0x98] sm:$0xf]
        %v422 = vld [vmem:[%s236 + $0x9c] sm:$0xf]
        %v423 = vld [vmem:[%s236 + $0xa0] sm:$0xf]
        %v424 = vld [vmem:[%s236 + $0xa4] sm:$0xf]
        %v425 = vld [vmem:[%s236 + $0xa8] sm:$0xf]
        %v426 = vld [vmem:[%s236 + $0xac] sm:$0xf]
        %v427 = vld [vmem:[%s236 + $0xb0] sm:$0xf]
        %v428 = vld [vmem:[%s236 + $0xb4] sm:$0xf]
        %v429 = vld [vmem:[%s236 + $0xb8] sm:$0xf]
        %v430 = vld [vmem:[%s236 + $0xbc] sm:$0xf]
        %v431 = vld [vmem:[%s236 + $0xc0] sm:$0xf]
        %v432 = vld [vmem:[%s236 + $0xc4] sm:$0xf]
        %v433 = vld [vmem:[%s236 + $0xc8] sm:$0xf]
        %v434 = vld [vmem:[%s236 + $0xcc] sm:$0xf]
        %v435 = vld [vmem:[%s236 + $0xd0] sm:$0xf]
        %v436 = vld [vmem:[%s236 + $0xd4] sm:$0xf]
        %v437 = vld [vmem:[%s236 + $0xd8] sm:$0xf]
        %v438 = vld [vmem:[%s236 + $0xdc] sm:$0xf]
        %v439 = vld [vmem:[%s236 + $0xe0] sm:$0xf]
        %v440 = vld [vmem:[%s236 + $0xe4] sm:$0xf]
        %v441 = vld [vmem:[%s236 + $0xe8] sm:$0xf]
        %v442 = vld [vmem:[%s236 + $0xec] sm:$0xf]
        %v443 = vld [vmem:[%s236 + $0xf0] sm:$0xf]
        %v444 = vld [vmem:[%s236 + $0xf4] sm:$0xf]
        %v445 = vld [vmem:[%s236 + $0xf8] sm:$0xf]
        %v446 = vld [vmem:[%s236 + $0xfc] sm:$0xf]
        %v447 = vld [vmem:[%s245] sm:$0xf]
        %v448 = vld [vmem:[%s245 + $0x4] sm:$0xf]
        %v449 = vld [vmem:[%s245 + $0x8] sm:$0xf]
        %v450 = vld [vmem:[%s245 + $0xc] sm:$0xf]
        %v451 = vld [vmem:[%s245 + $0x10] sm:$0xf]
        %v452 = vld [vmem:[%s245 + $0x14] sm:$0xf]
        %v453 = vld [vmem:[%s245 + $0x18] sm:$0xf]
        %v454 = vld [vmem:[%s245 + $0x1c] sm:$0xf]
        %v455 = vld [vmem:[%s245 + $0x20] sm:$0xf]
        %v456 = vld [vmem:[%s245 + $0x24] sm:$0xf]
        %v457 = vld [vmem:[%s245 + $0x28] sm:$0xf]
        %v458 = vld [vmem:[%s245 + $0x2c] sm:$0xf]
        %v459 = vld [vmem:[%s245 + $0x30] sm:$0xf]
        %v460 = vld [vmem:[%s245 + $0x34] sm:$0xf]
        %v461 = vld [vmem:[%s245 + $0x38] sm:$0xf]
        %v462 = vld [vmem:[%s245 + $0x3c] sm:$0xf]
        %v527 = vunpack.c.l.b16 %v383
        %v528 = vunpack.c.l.b16 %v384
        %v529 = vunpack.c.l.b16 %v385
        %v530 = vunpack.c.l.b16 %v386
        %v531 = vunpack.c.l.b16 %v387
        %v532 = vunpack.c.l.b16 %v388
        %v533 = vunpack.c.l.b16 %v389
        %v534 = vunpack.c.l.b16 %v390
        %v535 = vunpack.c.l.b16 %v391
        %v536 = vunpack.c.l.b16 %v392
        %v537 = vunpack.c.l.b16 %v393
        %v538 = vunpack.c.l.b16 %v394
        %v539 = vunpack.c.l.b16 %v395
        %v540 = vunpack.c.l.b16 %v396
        %v541 = vunpack.c.l.b16 %v397
        %v542 = vunpack.c.l.b16 %v398
        %v543 = vunpack.c.l.b16 %v399
        %v544 = vunpack.c.l.b16 %v400
        %v545 = vunpack.c.l.b16 %v401
        %v546 = vunpack.c.l.b16 %v402
        %v547 = vunpack.c.l.b16 %v403
        %v548 = vunpack.c.l.b16 %v404
        %v549 = vunpack.c.l.b16 %v405
        %v550 = vunpack.c.l.b16 %v406
        %v551 = vunpack.c.l.b16 %v407
        %v552 = vunpack.c.l.b16 %v408
        %v553 = vunpack.c.l.b16 %v409
        %v554 = vunpack.c.l.b16 %v410
        %v555 = vunpack.c.l.b16 %v411
        %v556 = vunpack.c.l.b16 %v412
        %v557 = vunpack.c.l.b16 %v413
        %v558 = vunpack.c.l.b16 %v414
        %v559 = vunpack.c.l.b16 %v415
        %v560 = vunpack.c.l.b16 %v416
        %v561 = vunpack.c.l.b16 %v417
        %v562 = vunpack.c.l.b16 %v418
        %v563 = vunpack.c.l.b16 %v419
        %v564 = vunpack.c.l.b16 %v420
        %v565 = vunpack.c.l.b16 %v421
        %v566 = vunpack.c.l.b16 %v422
        %v567 = vunpack.c.l.b16 %v423
        %v568 = vunpack.c.l.b16 %v424
        %v569 = vunpack.c.l.b16 %v425
        %v570 = vunpack.c.l.b16 %v426
        %v571 = vunpack.c.l.b16 %v427
        %v572 = vunpack.c.l.b16 %v428
        %v573 = vunpack.c.l.b16 %v429
        %v574 = vunpack.c.l.b16 %v430
        %v575 = vunpack.c.l.b16 %v431
        %v576 = vunpack.c.l.b16 %v432
        %v577 = vunpack.c.l.b16 %v433
        %v578 = vunpack.c.l.b16 %v434
        %v579 = vunpack.c.l.b16 %v435
        %v580 = vunpack.c.l.b16 %v436
        %v581 = vunpack.c.l.b16 %v437
        %v582 = vunpack.c.l.b16 %v438
        %v583 = vunpack.c.l.b16 %v439
        %v584 = vunpack.c.l.b16 %v440
        %v585 = vunpack.c.l.b16 %v441
        %v586 = vunpack.c.l.b16 %v442
        %v587 = vunpack.c.l.b16 %v443
        %v588 = vunpack.c.l.b16 %v444
        %v589 = vunpack.c.l.b16 %v445
        %v590 = vunpack.c.l.b16 %v446
        %v591 = vpack.c.b16 %v528, %v527
        %v592 = vpack.c.b16 %v530, %v529
        %v593 = vpack.c.b16 %v532, %v531
        %v594 = vpack.c.b16 %v534, %v533
        %v595 = vpack.c.b16 %v536, %v535
        %v596 = vpack.c.b16 %v538, %v537
        %v597 = vpack.c.b16 %v540, %v539
        %v598 = vpack.c.b16 %v542, %v541
        %v599 = vpack.c.b16 %v544, %v543
        %v600 = vpack.c.b16 %v546, %v545
        %v601 = vpack.c.b16 %v548, %v547
        %v602 = vpack.c.b16 %v550, %v549
        %v603 = vpack.c.b16 %v552, %v551
        %v604 = vpack.c.b16 %v554, %v553
        %v605 = vpack.c.b16 %v556, %v555
        %v606 = vpack.c.b16 %v558, %v557
        %v607 = vpack.c.b16 %v560, %v559
        %v608 = vpack.c.b16 %v562, %v561
        %v609 = vpack.c.b16 %v564, %v563
        %v610 = vpack.c.b16 %v566, %v565
        %v611 = vpack.c.b16 %v568, %v567
        %v612 = vpack.c.b16 %v570, %v569
        %v613 = vpack.c.b16 %v572, %v571
        %v614 = vpack.c.b16 %v574, %v573
        %v615 = vpack.c.b16 %v576, %v575
        %v616 = vpack.c.b16 %v578, %v577
        %v617 = vpack.c.b16 %v580, %v579
        %v618 = vpack.c.b16 %v582, %v581
        %v619 = vpack.c.b16 %v584, %v583
        %v620 = vpack.c.b16 %v586, %v585
        %v621 = vpack.c.b16 %v588, %v587
        %v622 = vpack.c.b16 %v590, %v589
        %v671 = vunpack.c.l.b16 %v447
        %v672 = vunpack.c.l.b16 %v448
        %v673 = vunpack.c.l.b16 %v449
        %v674 = vunpack.c.l.b16 %v450
        %v675 = vunpack.c.l.b16 %v451
        %v676 = vunpack.c.l.b16 %v452
        %v677 = vunpack.c.l.b16 %v453
        %v678 = vunpack.c.l.b16 %v454
        %v679 = vunpack.c.l.b16 %v455
        %v680 = vunpack.c.l.b16 %v456
        %v681 = vunpack.c.l.b16 %v457
        %v682 = vunpack.c.l.b16 %v458
        %v683 = vunpack.c.l.b16 %v459
        %v684 = vunpack.c.l.b16 %v460
        %v685 = vunpack.c.l.b16 %v461
        %v686 = vunpack.c.l.b16 %v462
        %v687 = vpack.c.b16 %v672, %v671
        %v688 = vpack.c.b16 %v674, %v673
        %v689 = vpack.c.b16 %v676, %v675
        %v690 = vpack.c.b16 %v678, %v677
        %v691 = vpack.c.b16 %v680, %v679
        %v692 = vpack.c.b16 %v682, %v681
        %v693 = vpack.c.b16 %v684, %v683
        %v694 = vpack.c.b16 %v686, %v685
        %703 = vmatpush.bf16.msra.mxu0 %v694
        %704 = vmatpush.bf16.msra.mxu0 %v693
        %705 = vmatpush.bf16.msra.mxu0 %v692
        %706 = vmatpush.bf16.msra.mxu0 %v691
        %707 = vmatpush.bf16.msra.mxu0 %v690
        %708 = vmatpush.bf16.msra.mxu0 %v689
        %709 = vmatpush.bf16.msra.mxu0 %v688
        %710 = vmatpush.bf16.msra.mxu0 %v687
        %711 = vmatmul.bf16.gmra.mxu0 %v591
        %v712 = vpop.f32.mrf.mxu0
        %v713 = vadd.f32 0.0, %v712
        %v714 = vpop.f32.mrf.mxu0
        %v715 = vadd.f32 0.0, %v714
        %716 = vmatmul.bf16.gmra.mxu0 %v592
        %v717 = vpop.f32.mrf.mxu0
        %v718 = vadd.f32 0.0, %v717
        %v719 = vpop.f32.mrf.mxu0
        %v720 = vadd.f32 0.0, %v719
        %721 = vmatmul.bf16.gmra.mxu0 %v593
        %v722 = vpop.f32.mrf.mxu0
        %v723 = vadd.f32 0.0, %v722
        %v724 = vpop.f32.mrf.mxu0
        %v725 = vadd.f32 0.0, %v724
        %726 = vmatmul.bf16.gmra.mxu0 %v594
        %v727 = vpop.f32.mrf.mxu0
        %v728 = vadd.f32 0.0, %v727
        %v729 = vpop.f32.mrf.mxu0
        %v730 = vadd.f32 0.0, %v729
        %731 = vmatmul.bf16.gmra.mxu0 %v595
        %v732 = vpop.f32.mrf.mxu0
        %v733 = vadd.f32 0.0, %v732
        %v734 = vpop.f32.mrf.mxu0
        %v735 = vadd.f32 0.0, %v734
        %736 = vmatmul.bf16.gmra.mxu0 %v596
        %v737 = vpop.f32.mrf.mxu0
        %v738 = vadd.f32 0.0, %v737
        %v739 = vpop.f32.mrf.mxu0
        %v740 = vadd.f32 0.0, %v739
        %741 = vmatmul.bf16.gmra.mxu0 %v597
        %v742 = vpop.f32.mrf.mxu0
        %v743 = vadd.f32 0.0, %v742
        %v744 = vpop.f32.mrf.mxu0
        %v745 = vadd.f32 0.0, %v744
        %746 = vmatmul.bf16.gmra.mxu0 %v598
        %v747 = vpop.f32.mrf.mxu0
        %v748 = vadd.f32 0.0, %v747
        %v749 = vpop.f32.mrf.mxu0
        %v750 = vadd.f32 0.0, %v749
        %751 = vmatmul.bf16.gmra.mxu0 %v599
        %v752 = vpop.f32.mrf.mxu0
        %v753 = vadd.f32 0.0, %v752
        %v754 = vpop.f32.mrf.mxu0
        %v755 = vadd.f32 0.0, %v754
        %756 = vmatmul.bf16.gmra.mxu0 %v600
        %v757 = vpop.f32.mrf.mxu0
        %v758 = vadd.f32 0.0, %v757
        %v759 = vpop.f32.mrf.mxu0
        %v760 = vadd.f32 0.0, %v759
        %761 = vmatmul.bf16.gmra.mxu0 %v601
        %v762 = vpop.f32.mrf.mxu0
        %v763 = vadd.f32 0.0, %v762
        %v764 = vpop.f32.mrf.mxu0
        %v765 = vadd.f32 0.0, %v764
        %766 = vmatmul.bf16.gmra.mxu0 %v602
        %v767 = vpop.f32.mrf.mxu0
        %v768 = vadd.f32 0.0, %v767
        %v769 = vpop.f32.mrf.mxu0
        %v770 = vadd.f32 0.0, %v769
        %771 = vmatmul.bf16.gmra.mxu0 %v603
        %v772 = vpop.f32.mrf.mxu0
        %v773 = vadd.f32 0.0, %v772
        %v774 = vpop.f32.mrf.mxu0
        %v775 = vadd.f32 0.0, %v774
        %776 = vmatmul.bf16.gmra.mxu0 %v604
        %v777 = vpop.f32.mrf.mxu0
        %v778 = vadd.f32 0.0, %v777
        %v779 = vpop.f32.mrf.mxu0
        %v780 = vadd.f32 0.0, %v779
        %781 = vmatmul.bf16.gmra.mxu0 %v605
        %v782 = vpop.f32.mrf.mxu0
        %v783 = vadd.f32 0.0, %v782
        %v784 = vpop.f32.mrf.mxu0
        %v785 = vadd.f32 0.0, %v784
        %786 = vmatmul.bf16.gmra.mxu0 %v606
        %v787 = vpop.f32.mrf.mxu0
        %v788 = vadd.f32 0.0, %v787
        %v789 = vpop.f32.mrf.mxu0
        %v790 = vadd.f32 0.0, %v789
        %791 = vmatmul.bf16.gmra.mxu0 %v607
        %v792 = vpop.f32.mrf.mxu0
        %v793 = vadd.f32 0.0, %v792
        %v794 = vpop.f32.mrf.mxu0
        %v795 = vadd.f32 0.0, %v794
        %796 = vmatmul.bf16.gmra.mxu0 %v608
        %v797 = vpop.f32.mrf.mxu0
        %v798 = vadd.f32 0.0, %v797
        %v799 = vpop.f32.mrf.mxu0
        %v800 = vadd.f32 0.0, %v799
        %801 = vmatmul.bf16.gmra.mxu0 %v609
        %v802 = vpop.f32.mrf.mxu0
        %v803 = vadd.f32 0.0, %v802
        %v804 = vpop.f32.mrf.mxu0
        %v805 = vadd.f32 0.0, %v804
        %806 = vmatmul.bf16.gmra.mxu0 %v610
        %v807 = vpop.f32.mrf.mxu0
        %v808 = vadd.f32 0.0, %v807
        %v809 = vpop.f32.mrf.mxu0
        %v810 = vadd.f32 0.0, %v809
        %811 = vmatmul.bf16.gmra.mxu0 %v611
        %v812 = vpop.f32.mrf.mxu0
        %v813 = vadd.f32 0.0, %v812
        %v814 = vpop.f32.mrf.mxu0
        %v815 = vadd.f32 0.0, %v814
        %816 = vmatmul.bf16.gmra.mxu0 %v612
        %v817 = vpop.f32.mrf.mxu0
        %v818 = vadd.f32 0.0, %v817
        %v819 = vpop.f32.mrf.mxu0
        %v820 = vadd.f32 0.0, %v819
        %821 = vmatmul.bf16.gmra.mxu0 %v613
        %v822 = vpop.f32.mrf.mxu0
        %v823 = vadd.f32 0.0, %v822
        %v824 = vpop.f32.mrf.mxu0
        %v825 = vadd.f32 0.0, %v824
        %826 = vmatmul.bf16.gmra.mxu0 %v614
        %v827 = vpop.f32.mrf.mxu0
        %v828 = vadd.f32 0.0, %v827
        %v829 = vpop.f32.mrf.mxu0
        %v830 = vadd.f32 0.0, %v829
        %831 = vmatmul.bf16.gmra.mxu0 %v615
        %v832 = vpop.f32.mrf.mxu0
        %v833 = vadd.f32 0.0, %v832
        %v834 = vpop.f32.mrf.mxu0
        %v835 = vadd.f32 0.0, %v834
        %836 = vmatmul.bf16.gmra.mxu0 %v616
        %v837 = vpop.f32.mrf.mxu0
        %v838 = vadd.f32 0.0, %v837
        %v839 = vpop.f32.mrf.mxu0
        %v840 = vadd.f32 0.0, %v839
        %841 = vmatmul.bf16.gmra.mxu0 %v617
        %v842 = vpop.f32.mrf.mxu0
        %v843 = vadd.f32 0.0, %v842
        %v844 = vpop.f32.mrf.mxu0
        %v845 = vadd.f32 0.0, %v844
        %846 = vmatmul.bf16.gmra.mxu0 %v618
        %v847 = vpop.f32.mrf.mxu0
        %v848 = vadd.f32 0.0, %v847
        %v849 = vpop.f32.mrf.mxu0
        %v850 = vadd.f32 0.0, %v849
        %851 = vmatmul.bf16.gmra.mxu0 %v619
        %v852 = vpop.f32.mrf.mxu0
        %v853 = vadd.f32 0.0, %v852
        %v854 = vpop.f32.mrf.mxu0
        %v855 = vadd.f32 0.0, %v854
        %856 = vmatmul.bf16.gmra.mxu0 %v620
        %v857 = vpop.f32.mrf.mxu0
        %v858 = vadd.f32 0.0, %v857
        %v859 = vpop.f32.mrf.mxu0
        %v860 = vadd.f32 0.0, %v859
        %861 = vmatmul.bf16.gmra.mxu0 %v621
        %v862 = vpop.f32.mrf.mxu0
        %v863 = vadd.f32 0.0, %v862
        %v864 = vpop.f32.mrf.mxu0
        %v865 = vadd.f32 0.0, %v864
        %866 = vmatmul.bf16.gmra.mxu0 %v622
        %v867 = vpop.f32.mrf.mxu0
        %v868 = vadd.f32 0.0, %v867
        %v869 = vpop.f32.mrf.mxu0
        %v870 = vadd.f32 0.0, %v869
        %871 = vdwg.mxu0
        %v872 = vadd.f32 %v319, %v713
        %v873 = vadd.f32 %v320, %v715
        %v874 = vadd.f32 %v321, %v718
        %v875 = vadd.f32 %v322, %v720
        %v876 = vadd.f32 %v323, %v723
        %v877 = vadd.f32 %v324, %v725
        %v878 = vadd.f32 %v325, %v728
        %v879 = vadd.f32 %v326, %v730
        %v880 = vadd.f32 %v327, %v733
        %v881 = vadd.f32 %v328, %v735
        %v882 = vadd.f32 %v329, %v738
        %v883 = vadd.f32 %v330, %v740
        %v884 = vadd.f32 %v331, %v743
        %v885 = vadd.f32 %v332, %v745
        %v886 = vadd.f32 %v333, %v748
        %v887 = vadd.f32 %v334, %v750
        %v888 = vadd.f32 %v335, %v753
        %v889 = vadd.f32 %v336, %v755
        %v890 = vadd.f32 %v337, %v758
        %v891 = vadd.f32 %v338, %v760
        %v892 = vadd.f32 %v339, %v763
        %v893 = vadd.f32 %v340, %v765
        %v894 = vadd.f32 %v341, %v768
        %v895 = vadd.f32 %v342, %v770
        %v896 = vadd.f32 %v343, %v773
        %v897 = vadd.f32 %v344, %v775
        %v898 = vadd.f32 %v345, %v778
        %v899 = vadd.f32 %v346, %v780
        %v900 = vadd.f32 %v347, %v783
        %v901 = vadd.f32 %v348, %v785
        %v902 = vadd.f32 %v349, %v788
        %v903 = vadd.f32 %v350, %v790
        %v904 = vadd.f32 %v351, %v793
        %v905 = vadd.f32 %v352, %v795
        %v906 = vadd.f32 %v353, %v798
        %v907 = vadd.f32 %v354, %v800
        %v908 = vadd.f32 %v355, %v803
        %v909 = vadd.f32 %v356, %v805
        %v910 = vadd.f32 %v357, %v808
        %v911 = vadd.f32 %v358, %v810
        %v912 = vadd.f32 %v359, %v813
        %v913 = vadd.f32 %v360, %v815
        %v914 = vadd.f32 %v361, %v818
        %v915 = vadd.f32 %v362, %v820
        %v916 = vadd.f32 %v363, %v823
        %v917 = vadd.f32 %v364, %v825
        %v918 = vadd.f32 %v365, %v828
        %v919 = vadd.f32 %v366, %v830
        %v920 = vadd.f32 %v367, %v833
        %v921 = vadd.f32 %v368, %v835
        %v922 = vadd.f32 %v369, %v838
        %v923 = vadd.f32 %v370, %v840
        %v924 = vadd.f32 %v371, %v843
        %v925 = vadd.f32 %v372, %v845
        %v926 = vadd.f32 %v373, %v848
        %v927 = vadd.f32 %v374, %v850
        %v928 = vadd.f32 %v375, %v853
        %v929 = vadd.f32 %v376, %v855
        %v930 = vadd.f32 %v377, %v858
        %v931 = vadd.f32 %v378, %v860
        %v932 = vadd.f32 %v379, %v863
        %v933 = vadd.f32 %v380, %v865
        %v934 = vadd.f32 %v381, %v868
        %v935 = vadd.f32 %v382, %v870
        %936 = vst [vmem:[#allocation2] sm:$0xff] %v872
        %937 = vst [vmem:[#allocation2 + $0x8] sm:$0xff] %v873
        %938 = vst [vmem:[#allocation2 + $0x10] sm:$0xff] %v874
        %939 = vst [vmem:[#allocation2 + $0x18] sm:$0xff] %v875
        %940 = vst [vmem:[#allocation2 + $0x20] sm:$0xff] %v876
        %941 = vst [vmem:[#allocation2 + $0x28] sm:$0xff] %v877
        %942 = vst [vmem:[#allocation2 + $0x30] sm:$0xff] %v878
        %943 = vst [vmem:[#allocation2 + $0x38] sm:$0xff] %v879
        %944 = vst [vmem:[#allocation2 + $0x40] sm:$0xff] %v880
        %945 = vst [vmem:[#allocation2 + $0x48] sm:$0xff] %v881
        %946 = vst [vmem:[#allocation2 + $0x50] sm:$0xff] %v882
        %947 = vst [vmem:[#allocation2 + $0x58] sm:$0xff] %v883
        %948 = vst [vmem:[#allocation2 + $0x60] sm:$0xff] %v884
        %949 = vst [vmem:[#allocation2 + $0x68] sm:$0xff] %v885
        %950 = vst [vmem:[#allocation2 + $0x70] sm:$0xff] %v886
        %951 = vst [vmem:[#allocation2 + $0x78] sm:$0xff] %v887
        %952 = vst [vmem:[#allocation2 + $0x80] sm:$0xff] %v888
        %953 = vst [vmem:[#allocation2 + $0x88] sm:$0xff] %v889
        %954 = vst [vmem:[#allocation2 + $0x90] sm:$0xff] %v890
        %955 = vst [vmem:[#allocation2 + $0x98] sm:$0xff] %v891
        %956 = vst [vmem:[#allocation2 + $0xa0] sm:$0xff] %v892
        %957 = vst [vmem:[#allocation2 + $0xa8] sm:$0xff] %v893
        %958 = vst [vmem:[#allocation2 + $0xb0] sm:$0xff] %v894
        %959 = vst [vmem:[#allocation2 + $0xb8] sm:$0xff] %v895
        %960 = vst [vmem:[#allocation2 + $0xc0] sm:$0xff] %v896
        %961 = vst [vmem:[#allocation2 + $0xc8] sm:$0xff] %v897
        %962 = vst [vmem:[#allocation2 + $0xd0] sm:$0xff] %v898
        %963 = vst [vmem:[#allocation2 + $0xd8] sm:$0xff] %v899
        %964 = vst [vmem:[#allocation2 + $0xe0] sm:$0xff] %v900
        %965 = vst [vmem:[#allocation2 + $0xe8] sm:$0xff] %v901
        %966 = vst [vmem:[#allocation2 + $0xf0] sm:$0xff] %v902
        %967 = vst [vmem:[#allocation2 + $0xf8] sm:$0xff] %v903
        %968 = vst [vmem:[#allocation2 + $0x100] sm:$0xff] %v904
        %969 = vst [vmem:[#allocation2 + $0x108] sm:$0xff] %v905
        %970 = vst [vmem:[#allocation2 + $0x110] sm:$0xff] %v906
        %971 = vst [vmem:[#allocation2 + $0x118] sm:$0xff] %v907
        %972 = vst [vmem:[#allocation2 + $0x120] sm:$0xff] %v908
        %973 = vst [vmem:[#allocation2 + $0x128] sm:$0xff] %v909
        %974 = vst [vmem:[#allocation2 + $0x130] sm:$0xff] %v910
        %975 = vst [vmem:[#allocation2 + $0x138] sm:$0xff] %v911
        %976 = vst [vmem:[#allocation2 + $0x140] sm:$0xff] %v912
        %977 = vst [vmem:[#allocation2 + $0x148] sm:$0xff] %v913
        %978 = vst [vmem:[#allocation2 + $0x150] sm:$0xff] %v914
        %979 = vst [vmem:[#allocation2 + $0x158] sm:$0xff] %v915
        %980 = vst [vmem:[#allocation2 + $0x160] sm:$0xff] %v916
        %981 = vst [vmem:[#allocation2 + $0x168] sm:$0xff] %v917
        %982 = vst [vmem:[#allocation2 + $0x170] sm:$0xff] %v918
        %983 = vst [vmem:[#allocation2 + $0x178] sm:$0xff] %v919
        %984 = vst [vmem:[#allocation2 + $0x180] sm:$0xff] %v920
        %985 = vst [vmem:[#allocation2 + $0x188] sm:$0xff] %v921
        %986 = vst [vmem:[#allocation2 + $0x190] sm:$0xff] %v922
        %987 = vst [vmem:[#allocation2 + $0x198] sm:$0xff] %v923
        %988 = vst [vmem:[#allocation2 + $0x1a0] sm:$0xff] %v924
        %989 = vst [vmem:[#allocation2 + $0x1a8] sm:$0xff] %v925
        %990 = vst [vmem:[#allocation2 + $0x1b0] sm:$0xff] %v926
        %991 = vst [vmem:[#allocation2 + $0x1b8] sm:$0xff] %v927
        %992 = vst [vmem:[#allocation2 + $0x1c0] sm:$0xff] %v928
        %993 = vst [vmem:[#allocation2 + $0x1c8] sm:$0xff] %v929
        %994 = vst [vmem:[#allocation2 + $0x1d0] sm:$0xff] %v930
        %995 = vst [vmem:[#allocation2 + $0x1d8] sm:$0xff] %v931
        %996 = vst [vmem:[#allocation2 + $0x1e0] sm:$0xff] %v932
        %997 = vst [vmem:[#allocation2 + $0x1e8] sm:$0xff] %v933
        %998 = vst [vmem:[#allocation2 + $0x1f0] sm:$0xff] %v934
        %999 = vst [vmem:[#allocation2 + $0x1f8] sm:$0xff] %v935
        // Predicated region
        $region37: #{fn.1} parent=31 // pred_check
          %p1000 = pneg %p251
        $region38: #{fn.1} parent=31 // pred_check_branch
          %1002 = sbr.rel (%p1000) target = $region40
        $region39: #{fn.1} parent=31 // pred_region
          %v1003 = vld [vmem:[#allocation2] sm:$0xff]
          %v1004 = vld [vmem:[#allocation2 + $0x8] sm:$0xff]
          %v1005 = vld [vmem:[#allocation2 + $0x10] sm:$0xff]
          %v1006 = vld [vmem:[#allocation2 + $0x18] sm:$0xff]
          %v1007 = vld [vmem:[#allocation2 + $0x20] sm:$0xff]
          %v1008 = vld [vmem:[#allocation2 + $0x28] sm:$0xff]
          %v1009 = vld [vmem:[#allocation2 + $0x30] sm:$0xff]
          %v1010 = vld [vmem:[#allocation2 + $0x38] sm:$0xff]
          %v1011 = vld [vmem:[#allocation2 + $0x40] sm:$0xff]
          %v1012 = vld [vmem:[#allocation2 + $0x48] sm:$0xff]
          %v1013 = vld [vmem:[#allocation2 + $0x50] sm:$0xff]
          %v1014 = vld [vmem:[#allocation2 + $0x58] sm:$0xff]
          %v1015 = vld [vmem:[#allocation2 + $0x60] sm:$0xff]
          %v1016 = vld [vmem:[#allocation2 + $0x68] sm:$0xff]
          %v1017 = vld [vmem:[#allocation2 + $0x70] sm:$0xff]
          %v1018 = vld [vmem:[#allocation2 + $0x78] sm:$0xff]
          %v1019 = vld [vmem:[#allocation2 + $0x80] sm:$0xff]
          %v1020 = vld [vmem:[#allocation2 + $0x88] sm:$0xff]
          %v1021 = vld [vmem:[#allocation2 + $0x90] sm:$0xff]
          %v1022 = vld [vmem:[#allocation2 + $0x98] sm:$0xff]
          %v1023 = vld [vmem:[#allocation2 + $0xa0] sm:$0xff]
          %v1024 = vld [vmem:[#allocation2 + $0xa8] sm:$0xff]
          %v1025 = vld [vmem:[#allocation2 + $0xb0] sm:$0xff]
          %v1026 = vld [vmem:[#allocation2 + $0xb8] sm:$0xff]
          %v1027 = vld [vmem:[#allocation2 + $0xc0] sm:$0xff]
          %v1028 = vld [vmem:[#allocation2 + $0xc8] sm:$0xff]
          %v1029 = vld [vmem:[#allocation2 + $0xd0] sm:$0xff]
          %v1030 = vld [vmem:[#allocation2 + $0xd8] sm:$0xff]
          %v1031 = vld [vmem:[#allocation2 + $0xe0] sm:$0xff]
          %v1032 = vld [vmem:[#allocation2 + $0xe8] sm:$0xff]
          %v1033 = vld [vmem:[#allocation2 + $0xf0] sm:$0xff]
          %v1034 = vld [vmem:[#allocation2 + $0xf8] sm:$0xff]
          %v1035 = vld [vmem:[#allocation2 + $0x100] sm:$0xff]
          %v1036 = vld [vmem:[#allocation2 + $0x108] sm:$0xff]
          %v1037 = vld [vmem:[#allocation2 + $0x110] sm:$0xff]
          %v1038 = vld [vmem:[#allocation2 + $0x118] sm:$0xff]
          %v1039 = vld [vmem:[#allocation2 + $0x120] sm:$0xff]
          %v1040 = vld [vmem:[#allocation2 + $0x128] sm:$0xff]
          %v1041 = vld [vmem:[#allocation2 + $0x130] sm:$0xff]
          %v1042 = vld [vmem:[#allocation2 + $0x138] sm:$0xff]
          %v1043 = vld [vmem:[#allocation2 + $0x140] sm:$0xff]
          %v1044 = vld [vmem:[#allocation2 + $0x148] sm:$0xff]
          %v1045 = vld [vmem:[#allocation2 + $0x150] sm:$0xff]
          %v1046 = vld [vmem:[#allocation2 + $0x158] sm:$0xff]
          %v1047 = vld [vmem:[#allocation2 + $0x160] sm:$0xff]
          %v1048 = vld [vmem:[#allocation2 + $0x168] sm:$0xff]
          %v1049 = vld [vmem:[#allocation2 + $0x170] sm:$0xff]
          %v1050 = vld [vmem:[#allocation2 + $0x178] sm:$0xff]
          %v1051 = vld [vmem:[#allocation2 + $0x180] sm:$0xff]
          %v1052 = vld [vmem:[#allocation2 + $0x188] sm:$0xff]
          %v1053 = vld [vmem:[#allocation2 + $0x190] sm:$0xff]
          %v1054 = vld [vmem:[#allocation2 + $0x198] sm:$0xff]
          %v1055 = vld [vmem:[#allocation2 + $0x1a0] sm:$0xff]
          %v1056 = vld [vmem:[#allocation2 + $0x1a8] sm:$0xff]
          %v1057 = vld [vmem:[#allocation2 + $0x1b0] sm:$0xff]
          %v1058 = vld [vmem:[#allocation2 + $0x1b8] sm:$0xff]
          %v1059 = vld [vmem:[#allocation2 + $0x1c0] sm:$0xff]
          %v1060 = vld [vmem:[#allocation2 + $0x1c8] sm:$0xff]
          %v1061 = vld [vmem:[#allocation2 + $0x1d0] sm:$0xff]
          %v1062 = vld [vmem:[#allocation2 + $0x1d8] sm:$0xff]
          %v1063 = vld [vmem:[#allocation2 + $0x1e0] sm:$0xff]
          %v1064 = vld [vmem:[#allocation2 + $0x1e8] sm:$0xff]
          %v1065 = vld [vmem:[#allocation2 + $0x1f0] sm:$0xff]
          %v1066 = vld [vmem:[#allocation2 + $0x1f8] sm:$0xff]
          %v1067 = vld [vmem:[%s249] sm:$0x1]
          %v1069 = vperm.slane %v1067, 0
          %v1071 = vadd.f32 %v1003, %v1069
          %v1072 = vadd.f32 %v1004, %v1069
          %v1073 = vadd.f32 %v1005, %v1069
          %v1074 = vadd.f32 %v1006, %v1069
          %v1075 = vadd.f32 %v1007, %v1069
          %v1076 = vadd.f32 %v1008, %v1069
          %v1077 = vadd.f32 %v1009, %v1069
          %v1078 = vadd.f32 %v1010, %v1069
          %v1079 = vadd.f32 %v1011, %v1069
          %v1080 = vadd.f32 %v1012, %v1069
          %v1081 = vadd.f32 %v1013, %v1069
          %v1082 = vadd.f32 %v1014, %v1069
          %v1083 = vadd.f32 %v1015, %v1069
          %v1084 = vadd.f32 %v1016, %v1069
          %v1085 = vadd.f32 %v1017, %v1069
          %v1086 = vadd.f32 %v1018, %v1069
          %v1087 = vadd.f32 %v1019, %v1069
          %v1088 = vadd.f32 %v1020, %v1069
          %v1089 = vadd.f32 %v1021, %v1069
          %v1090 = vadd.f32 %v1022, %v1069
          %v1091 = vadd.f32 %v1023, %v1069
          %v1092 = vadd.f32 %v1024, %v1069
          %v1093 = vadd.f32 %v1025, %v1069
          %v1094 = vadd.f32 %v1026, %v1069
          %v1095 = vadd.f32 %v1027, %v1069
          %v1096 = vadd.f32 %v1028, %v1069
          %v1097 = vadd.f32 %v1029, %v1069
          %v1098 = vadd.f32 %v1030, %v1069
          %v1099 = vadd.f32 %v1031, %v1069
          %v1100 = vadd.f32 %v1032, %v1069
          %v1101 = vadd.f32 %v1033, %v1069
          %v1102 = vadd.f32 %v1034, %v1069
          %v1103 = vadd.f32 %v1035, %v1069
          %v1104 = vadd.f32 %v1036, %v1069
          %v1105 = vadd.f32 %v1037, %v1069
          %v1106 = vadd.f32 %v1038, %v1069
          %v1107 = vadd.f32 %v1039, %v1069
          %v1108 = vadd.f32 %v1040, %v1069
          %v1109 = vadd.f32 %v1041, %v1069
          %v1110 = vadd.f32 %v1042, %v1069
          %v1111 = vadd.f32 %v1043, %v1069
          %v1112 = vadd.f32 %v1044, %v1069
          %v1113 = vadd.f32 %v1045, %v1069
          %v1114 = vadd.f32 %v1046, %v1069
          %v1115 = vadd.f32 %v1047, %v1069
          %v1116 = vadd.f32 %v1048, %v1069
          %v1117 = vadd.f32 %v1049, %v1069
          %v1118 = vadd.f32 %v1050, %v1069
          %v1119 = vadd.f32 %v1051, %v1069
          %v1120 = vadd.f32 %v1052, %v1069
          %v1121 = vadd.f32 %v1053, %v1069
          %v1122 = vadd.f32 %v1054, %v1069
          %v1123 = vadd.f32 %v1055, %v1069
          %v1124 = vadd.f32 %v1056, %v1069
          %v1125 = vadd.f32 %v1057, %v1069
          %v1126 = vadd.f32 %v1058, %v1069
          %v1127 = vadd.f32 %v1059, %v1069
          %v1128 = vadd.f32 %v1060, %v1069
          %v1129 = vadd.f32 %v1061, %v1069
          %v1130 = vadd.f32 %v1062, %v1069
          %v1131 = vadd.f32 %v1063, %v1069
          %v1132 = vadd.f32 %v1064, %v1069
          %v1133 = vadd.f32 %v1065, %v1069
          %v1134 = vadd.f32 %v1066, %v1069
          %v1135 = vmax.f32 %v1071, 0.0
          %v1136 = vmax.f32 %v1072, 0.0
          %v1137 = vmax.f32 %v1073, 0.0
          %v1138 = vmax.f32 %v1074, 0.0
          %v1139 = vmax.f32 %v1075, 0.0
          %v1140 = vmax.f32 %v1076, 0.0
          %v1141 = vmax.f32 %v1077, 0.0
          %v1142 = vmax.f32 %v1078, 0.0
          %v1143 = vmax.f32 %v1079, 0.0
          %v1144 = vmax.f32 %v1080, 0.0
          %v1145 = vmax.f32 %v1081, 0.0
          %v1146 = vmax.f32 %v1082, 0.0
          %v1147 = vmax.f32 %v1083, 0.0
          %v1148 = vmax.f32 %v1084, 0.0
          %v1149 = vmax.f32 %v1085, 0.0
          %v1150 = vmax.f32 %v1086, 0.0
          %v1151 = vmax.f32 %v1087, 0.0
          %v1152 = vmax.f32 %v1088, 0.0
          %v1153 = vmax.f32 %v1089, 0.0
          %v1154 = vmax.f32 %v1090, 0.0
          %v1155 = vmax.f32 %v1091, 0.0
          %v1156 = vmax.f32 %v1092, 0.0
          %v1157 = vmax.f32 %v1093, 0.0
          %v1158 = vmax.f32 %v1094, 0.0
          %v1159 = vmax.f32 %v1095, 0.0
          %v1160 = vmax.f32 %v1096, 0.0
          %v1161 = vmax.f32 %v1097, 0.0
          %v1162 = vmax.f32 %v1098, 0.0
          %v1163 = vmax.f32 %v1099, 0.0
          %v1164 = vmax.f32 %v1100, 0.0
          %v1165 = vmax.f32 %v1101, 0.0
          %v1166 = vmax.f32 %v1102, 0.0
          %v1167 = vmax.f32 %v1103, 0.0
          %v1168 = vmax.f32 %v1104, 0.0
          %v1169 = vmax.f32 %v1105, 0.0
          %v1170 = vmax.f32 %v1106, 0.0
          %v1171 = vmax.f32 %v1107, 0.0
          %v1172 = vmax.f32 %v1108, 0.0
          %v1173 = vmax.f32 %v1109, 0.0
          %v1174 = vmax.f32 %v1110, 0.0
          %v1175 = vmax.f32 %v1111, 0.0
          %v1176 = vmax.f32 %v1112, 0.0
          %v1177 = vmax.f32 %v1113, 0.0
          %v1178 = vmax.f32 %v1114, 0.0
          %v1179 = vmax.f32 %v1115, 0.0
          %v1180 = vmax.f32 %v1116, 0.0
          %v1181 = vmax.f32 %v1117, 0.0
          %v1182 = vmax.f32 %v1118, 0.0
          %v1183 = vmax.f32 %v1119, 0.0
          %v1184 = vmax.f32 %v1120, 0.0
          %v1185 = vmax.f32 %v1121, 0.0
          %v1186 = vmax.f32 %v1122, 0.0
          %v1187 = vmax.f32 %v1123, 0.0
          %v1188 = vmax.f32 %v1124, 0.0
          %v1189 = vmax.f32 %v1125, 0.0
          %v1190 = vmax.f32 %v1126, 0.0
          %v1191 = vmax.f32 %v1127, 0.0
          %v1192 = vmax.f32 %v1128, 0.0
          %v1193 = vmax.f32 %v1129, 0.0
          %v1194 = vmax.f32 %v1130, 0.0
          %v1195 = vmax.f32 %v1131, 0.0
          %v1196 = vmax.f32 %v1132, 0.0
          %v1197 = vmax.f32 %v1133, 0.0
          %v1198 = vmax.f32 %v1134, 0.0
          %v1199 = vpack.c.bf16 %v1135, %v1135
          %v1200 = vpack.c.bf16 %v1136, %v1136
          %v1201 = vpack.c.bf16 %v1137, %v1137
          %v1202 = vpack.c.bf16 %v1138, %v1138
          %v1203 = vpack.c.bf16 %v1139, %v1139
          %v1204 = vpack.c.bf16 %v1140, %v1140
          %v1205 = vpack.c.bf16 %v1141, %v1141
          %v1206 = vpack.c.bf16 %v1142, %v1142
          %v1207 = vpack.c.bf16 %v1143, %v1143
          %v1208 = vpack.c.bf16 %v1144, %v1144
          %v1209 = vpack.c.bf16 %v1145, %v1145
          %v1210 = vpack.c.bf16 %v1146, %v1146
          %v1211 = vpack.c.bf16 %v1147, %v1147
          %v1212 = vpack.c.bf16 %v1148, %v1148
          %v1213 = vpack.c.bf16 %v1149, %v1149
          %v1214 = vpack.c.bf16 %v1150, %v1150
          %v1215 = vpack.c.bf16 %v1151, %v1151
          %v1216 = vpack.c.bf16 %v1152, %v1152
          %v1217 = vpack.c.bf16 %v1153, %v1153
          %v1218 = vpack.c.bf16 %v1154, %v1154
          %v1219 = vpack.c.bf16 %v1155, %v1155
          %v1220 = vpack.c.bf16 %v1156, %v1156
          %v1221 = vpack.c.bf16 %v1157, %v1157
          %v1222 = vpack.c.bf16 %v1158, %v1158
          %v1223 = vpack.c.bf16 %v1159, %v1159
          %v1224 = vpack.c.bf16 %v1160, %v1160
          %v1225 = vpack.c.bf16 %v1161, %v1161
          %v1226 = vpack.c.bf16 %v1162, %v1162
          %v1227 = vpack.c.bf16 %v1163, %v1163
          %v1228 = vpack.c.bf16 %v1164, %v1164
          %v1229 = vpack.c.bf16 %v1165, %v1165
          %v1230 = vpack.c.bf16 %v1166, %v1166
          %v1231 = vpack.c.bf16 %v1167, %v1167
          %v1232 = vpack.c.bf16 %v1168, %v1168
          %v1233 = vpack.c.bf16 %v1169, %v1169
          %v1234 = vpack.c.bf16 %v1170, %v1170
          %v1235 = vpack.c.bf16 %v1171, %v1171
          %v1236 = vpack.c.bf16 %v1172, %v1172
          %v1237 = vpack.c.bf16 %v1173, %v1173
          %v1238 = vpack.c.bf16 %v1174, %v1174
          %v1239 = vpack.c.bf16 %v1175, %v1175
          %v1240 = vpack.c.bf16 %v1176, %v1176
          %v1241 = vpack.c.bf16 %v1177, %v1177
          %v1242 = vpack.c.bf16 %v1178, %v1178
          %v1243 = vpack.c.bf16 %v1179, %v1179
          %v1244 = vpack.c.bf16 %v1180, %v1180
          %v1245 = vpack.c.bf16 %v1181, %v1181
          %v1246 = vpack.c.bf16 %v1182, %v1182
          %v1247 = vpack.c.bf16 %v1183, %v1183
          %v1248 = vpack.c.bf16 %v1184, %v1184
          %v1249 = vpack.c.bf16 %v1185, %v1185
          %v1250 = vpack.c.bf16 %v1186, %v1186
          %v1251 = vpack.c.bf16 %v1187, %v1187
          %v1252 = vpack.c.bf16 %v1188, %v1188
          %v1253 = vpack.c.bf16 %v1189, %v1189
          %v1254 = vpack.c.bf16 %v1190, %v1190
          %v1255 = vpack.c.bf16 %v1191, %v1191
          %v1256 = vpack.c.bf16 %v1192, %v1192
          %v1257 = vpack.c.bf16 %v1193, %v1193
          %v1258 = vpack.c.bf16 %v1194, %v1194
          %v1259 = vpack.c.bf16 %v1195, %v1195
          %v1260 = vpack.c.bf16 %v1196, %v1196
          %v1261 = vpack.c.bf16 %v1197, %v1197
          %v1262 = vpack.c.bf16 %v1198, %v1198
          %1263 = vst [vmem:[%s228] sm:$0xf] %v1199
          %1264 = vst [vmem:[%s228 + $0x4] sm:$0xf] %v1200
          %1265 = vst [vmem:[%s228 + $0x8] sm:$0xf] %v1201
          %1266 = vst [vmem:[%s228 + $0xc] sm:$0xf] %v1202
          %1267 = vst [vmem:[%s228 + $0x10] sm:$0xf] %v1203
          %1268 = vst [vmem:[%s228 + $0x14] sm:$0xf] %v1204
          %1269 = vst [vmem:[%s228 + $0x18] sm:$0xf] %v1205
          %1270 = vst [vmem:[%s228 + $0x1c] sm:$0xf] %v1206
          %1271 = vst [vmem:[%s228 + $0x20] sm:$0xf] %v1207
          %1272 = vst [vmem:[%s228 + $0x24] sm:$0xf] %v1208
          %1273 = vst [vmem:[%s228 + $0x28] sm:$0xf] %v1209
          %1274 = vst [vmem:[%s228 + $0x2c] sm:$0xf] %v1210
          %1275 = vst [vmem:[%s228 + $0x30] sm:$0xf] %v1211
          %1276 = vst [vmem:[%s228 + $0x34] sm:$0xf] %v1212
          %1277 = vst [vmem:[%s228 + $0x38] sm:$0xf] %v1213
          %1278 = vst [vmem:[%s228 + $0x3c] sm:$0xf] %v1214
          %1279 = vst [vmem:[%s228 + $0x40] sm:$0xf] %v1215
          %1280 = vst [vmem:[%s228 + $0x44] sm:$0xf] %v1216
          %1281 = vst [vmem:[%s228 + $0x48] sm:$0xf] %v1217
          %1282 = vst [vmem:[%s228 + $0x4c] sm:$0xf] %v1218
          %1283 = vst [vmem:[%s228 + $0x50] sm:$0xf] %v1219
          %1284 = vst [vmem:[%s228 + $0x54] sm:$0xf] %v1220
          %1285 = vst [vmem:[%s228 + $0x58] sm:$0xf] %v1221
          %1286 = vst [vmem:[%s228 + $0x5c] sm:$0xf] %v1222
          %1287 = vst [vmem:[%s228 + $0x60] sm:$0xf] %v1223
          %1288 = vst [vmem:[%s228 + $0x64] sm:$0xf] %v1224
          %1289 = vst [vmem:[%s228 + $0x68] sm:$0xf] %v1225
          %1290 = vst [vmem:[%s228 + $0x6c] sm:$0xf] %v1226
          %1291 = vst [vmem:[%s228 + $0x70] sm:$0xf] %v1227
          %1292 = vst [vmem:[%s228 + $0x74] sm:$0xf] %v1228
          %1293 = vst [vmem:[%s228 + $0x78] sm:$0xf] %v1229
          %1294 = vst [vmem:[%s228 + $0x7c] sm:$0xf] %v1230
          %1295 = vst [vmem:[%s228 + $0x80] sm:$0xf] %v1231
          %1296 = vst [vmem:[%s228 + $0x84] sm:$0xf] %v1232
          %1297 = vst [vmem:[%s228 + $0x88] sm:$0xf] %v1233
          %1298 = vst [vmem:[%s228 + $0x8c] sm:$0xf] %v1234
          %1299 = vst [vmem:[%s228 + $0x90] sm:$0xf] %v1235
          %1300 = vst [vmem:[%s228 + $0x94] sm:$0xf] %v1236
          %1301 = vst [vmem:[%s228 + $0x98] sm:$0xf] %v1237
          %1302 = vst [vmem:[%s228 + $0x9c] sm:$0xf] %v1238
          %1303 = vst [vmem:[%s228 + $0xa0] sm:$0xf] %v1239
          %1304 = vst [vmem:[%s228 + $0xa4] sm:$0xf] %v1240
          %1305 = vst [vmem:[%s228 + $0xa8] sm:$0xf] %v1241
          %1306 = vst [vmem:[%s228 + $0xac] sm:$0xf] %v1242
          %1307 = vst [vmem:[%s228 + $0xb0] sm:$0xf] %v1243
          %1308 = vst [vmem:[%s228 + $0xb4] sm:$0xf] %v1244
          %1309 = vst [vmem:[%s228 + $0xb8] sm:$0xf] %v1245
          %1310 = vst [vmem:[%s228 + $0xbc] sm:$0xf] %v1246
          %1311 = vst [vmem:[%s228 + $0xc0] sm:$0xf] %v1247
          %1312 = vst [vmem:[%s228 + $0xc4] sm:$0xf] %v1248
          %1313 = vst [vmem:[%s228 + $0xc8] sm:$0xf] %v1249
          %1314 = vst [vmem:[%s228 + $0xcc] sm:$0xf] %v1250
          %1315 = vst [vmem:[%s228 + $0xd0] sm:$0xf] %v1251
          %1316 = vst [vmem:[%s228 + $0xd4] sm:$0xf] %v1252
          %1317 = vst [vmem:[%s228 + $0xd8] sm:$0xf] %v1253
          %1318 = vst [vmem:[%s228 + $0xdc] sm:$0xf] %v1254
          %1319 = vst [vmem:[%s228 + $0xe0] sm:$0xf] %v1255
          %1320 = vst [vmem:[%s228 + $0xe4] sm:$0xf] %v1256
          %1321 = vst [vmem:[%s228 + $0xe8] sm:$0xf] %v1257
          %1322 = vst [vmem:[%s228 + $0xec] sm:$0xf] %v1258
          %1323 = vst [vmem:[%s228 + $0xf0] sm:$0xf] %v1259
          %1324 = vst [vmem:[%s228 + $0xf4] sm:$0xf] %v1260
          %1325 = vst [vmem:[%s228 + $0xf8] sm:$0xf] %v1261
          %1326 = vst [vmem:[%s228 + $0xfc] sm:$0xf] %v1262
        $region40: #{fn.1} parent=31 // pred_fallthru
          _
        %s1327 = sand.u32 %s128, 1
        %s1328 = scalar_lea.sflag [#allocation4], %s1327
        %s1329 = sand.u32 %s128, 1
        %s1330 = smul.addr %s1329, 256
        %s1331 = scalar_lea.vmem [#allocation3], %s1330
        // Predicated region
        $region41: #{fn.1} parent=31 // pred_check
          %p1332 = pneg %p138
        $region42: #{fn.1} parent=31 // pred_check_branch
          %1334 = sbr.rel (%p1332) target = $region44
        $region43: #{fn.1} parent=31 // pred_region
          %s1335 = smul.u32 64, %s22
          %1337 = vsyncadd %s1328, 0
          %s1338 = sadd.s32 %s23, %s1335
          %s1339 = smul.addr %s1338, 4
          %s1340 = scalar_lea.hbm %s3, %s1339
          %s1341 = sshll.u32 %s1331, 4
          %s1342 = int_to_ptr.vmem [resolvable:$true] %s1341
          %s1343 = sshll.u32 %s1340, 4
          %s1344 = int_to_ptr.hbm [resolvable:$true] %s1343
          %1349 = dma.vmem_to_hbm [thread:$0]  %s1342, 4096, %s1344, %s1328, 64, 64, 4
        $region44: #{fn.1} parent=31 // pred_fallthru
          _
      $region32: #{fn.1} parent=5 // pred_fallthru
        _
      %p1350 = scmp.le.s32.totalorder 2, %s12
      // Predicated region
      $region45: #{fn.1} parent=5 // pred_check
        %p1351 = pneg %p1350
      $region46: #{fn.1} parent=5 // pred_check_branch
        %1353 = sbr.rel (%p1351) target = $region48
      $region47: #{fn.1} parent=5 // pred_region
        %s1354 = ssub.s32 %s12, 2
        // Predicated region
        $region49: #{fn.1} parent=47 // pred_check
          %p1355 = pneg %p144
        $region50: #{fn.1} parent=47 // pred_check_branch
          %1357 = sbr.rel (%p1355) target = $region52
        $region51: #{fn.1} parent=47 // pred_region
          %s1358 = sand.u32 %s129, 1
          %s1359 = scalar_lea.sflag [#allocation4], %s1358
          %s1360 = sand.u32 %s129, 1
          %s1361 = smul.addr %s1360, 256
          %s1362 = scalar_lea.vmem [#allocation3], %s1361
          %1364 = dma.done %s1359, 4096
        $region52: #{fn.1} parent=47 // pred_fallthru
          _
      $region48: #{fn.1} parent=5 // pred_fallthru
        _
    $region6: #{fn.1} parent=1 // loop_footer
      %s16 = sadd.s32 1, %s12
    $region7: #{fn.1} parent=1 // loop_footer_branch
      %11 = sbr.rel target = $region3
    $region8: #{fn.1} parent=1 // loop_exit
      _
    %1365 = vsyncpa [#allocation4], 1
    %s1366 = scalar_lea.sflag [#allocation4], 1
    %1367 = vsyncpa %s1366, 1

</llo_original>
